<compile_context>
chip_gen: v7x
topology: tpu7x:2x2x1
jax: 0.10.0
libtpu: 0.0.40
codegen_flags: <defaults>
</compile_context>

<pallas_src>
import functools

import jax
import jax.numpy as jnp
from jax import lax
from jax.experimental import pallas as pl
from jax.experimental.pallas import tpu as pltpu

LN_EPS = 1e-5                       # PyTorch nn.LayerNorm default
_SQRT_2_OVER_PI = 0.7978845608028654
_INV_SQRT_2 = 0.7071067811865476


# ---------------------------------------------------------------------------
# Kernel
# ---------------------------------------------------------------------------

def _linear_ln_gelu(h, w, b, gamma, beta, *, ln_n, apply_gelu,
                    compute_dtype, act_dtype, gelu_approx):
    """One Linear -> LayerNorm -> (GELU) layer on a (tile, dim) block.

    Matmul: low-precision operands, f32 MXU accumulation. LayerNorm stats in
    f32. Feature dims may be zero-padded to a lane multiple: padded weight
    cols / bias / gamma / beta are zero, so padded lanes stay exactly 0 and
    `ln_n` (the true feature width) is the LayerNorm divisor.
    """
    y = jnp.dot(h.astype(compute_dtype), w, preferred_element_type=jnp.float32)
    y = y + b.astype(jnp.float32)
    # One-pass LayerNorm statistics (one cross-lane sweep each); rsqrt -> EUP.
    # NOTE: E[y^2]-E[y]^2 can lose precision if the post-linear mean is large
    # vs. the std; acceptable for normalized nets (clamped at 0).
    # TODO(synk): if profiling shows the two XLU lane-reductions binding on
    # v6e/v7x, fold these sums into an MXU matmul against a ones vector.
    inv_n = jnp.float32(1.0 / ln_n)
    mu = jnp.sum(y, axis=-1, keepdims=True) * inv_n
    var = jnp.maximum(jnp.sum(y * y, axis=-1, keepdims=True) * inv_n - mu * mu, 0.0)
    y = (y - mu) * lax.rsqrt(var + LN_EPS) * gamma.astype(jnp.float32) \
        + beta.astype(jnp.float32)
    if not apply_gelu:
        return y                                   # final layer stays f32
    y = y.astype(act_dtype)                        # bf16 on v6e/v7x, f32 on v5e
    if gelu_approx:
        # tanh-approx GELU: transcendental goes to the otherwise-idle EUP slot
        # and overlaps the MXU; ~3e-3 max deviation from exact erf GELU.
        c0 = jnp.asarray(_SQRT_2_OVER_PI, act_dtype)
        c1 = jnp.asarray(0.044715, act_dtype)
        half = jnp.asarray(0.5, act_dtype)
        one = jnp.asarray(1.0, act_dtype)
        return half * y * (one + jnp.tanh(c0 * (y + c1 * y * y * y)))
    # Exact erf GELU (PyTorch nn.GELU() default) -- VALU polynomial in f32.
    yf = y.astype(jnp.float32)
    return (0.5 * yf * (1.0 + lax.erf(yf * jnp.float32(_INV_SQRT_2)))).astype(act_dtype)


def projection_mlp_kernel(
    x_ref,
    w1_ref, b1_ref, g1_ref, be1_ref,
    w2_ref, b2_ref, g2_ref, be2_ref,
    w3_ref, b3_ref, g3_ref, be3_ref,
    o_ref,
    *, n_hidden, n_out, compute_dtype, act_dtype, gelu_approx,
):
    lyr = functools.partial(_linear_ln_gelu, compute_dtype=compute_dtype,
                            act_dtype=act_dtype, gelu_approx=gelu_approx)
    h = x_ref[...]                     # already in compute_dtype: no cast pass
    h = lyr(h, w1_ref[...], b1_ref[...], g1_ref[...], be1_ref[...],
            ln_n=n_hidden, apply_gelu=True)
    h = lyr(h, w2_ref[...], b2_ref[...], g2_ref[...], be2_ref[...],
            ln_n=n_hidden, apply_gelu=True)
    h = lyr(h, w3_ref[...], b3_ref[...], g3_ref[...], be3_ref[...],
            ln_n=n_out, apply_gelu=False)
    o_ref[...] = h.astype(o_ref.dtype)


# ---------------------------------------------------------------------------
# Device heuristics (all cached / off the hot path)
# ---------------------------------------------------------------------------

def _round_up(n, m):
    return ((n + m - 1) // m) * m


@functools.lru_cache(maxsize=None)
def _vmem_limit_bytes():
    # Leave ~1/8 headroom below physical VMEM; conservative 56 MiB fallback
    # (safe on v5e / v6e / v7x) if the device cannot be queried.
    try:
        cap = int(pltpu.get_tpu_info().vmem_capacity_bytes)
        return cap * 7 // 8
    except Exception:  # noqa: BLE001 - capability query only
        return 56 * 1024 * 1024


@functools.lru_cache(maxsize=None)
def _max_batch_tile():
    # v7x has 64 MiB VMEM per TensorCore -> cap the batch tile at 256 there;
    # 128 MiB chips (v5e / v6e) can afford 512-row tiles.
    try:
        cap = int(pltpu.get_tpu_info().vmem_capacity_bytes)
    except Exception:  # noqa: BLE001
        return 256
    return 512 if cap >= 96 * 1024 * 1024 else 256


def _default_act_dtype(compute_dtype):
    if jnp.dtype(compute_dtype) == jnp.dtype(jnp.float32):
        return jnp.dtype(jnp.float32)
    try:
        kind = jax.devices()[0].device_kind.lower()
    except Exception:  # noqa: BLE001
        kind = ""
    # v4 / v5e lack bf16 VPU/EUP -- keep elementwise (LN / GELU) math in f32.
    if "v4" in kind or "v5" in kind:
        return jnp.dtype(jnp.float32)
    return jnp.dtype(compute_dtype)


@functools.lru_cache(maxsize=None)
def _single_buffer_supported():
    """One-time probe (cached, off the hot path): can this jax build
    single-buffer a grid-invariant operand via pipeline_mode=pl.Buffered(1)?"""
    if not hasattr(pl, "Buffered"):
        return False
    try:
        def k(w_ref, o_ref):
            o_ref[...] = w_ref[...] + jnp.float32(1.0)

        f = pl.pallas_call(
            k,
            out_shape=jax.ShapeDtypeStruct((8, 128), jnp.float32),
            grid_spec=pltpu.PrefetchScalarGridSpec(
                num_scalar_prefetch=0,
                grid=(2,),
                in_specs=[pl.BlockSpec((8, 128), lambda i: (0, 0),
                                       pipeline_mode=pl.Buffered(1))],
                out_specs=pl.BlockSpec((8, 128), lambda i: (0, 0)),
            ),
        )
        jax.block_until_ready(f(jnp.zeros((8, 128), jnp.float32)))
        return True
    except Exception:  # noqa: BLE001 - one-time capability probe only
        return False


def _batch_tiling(B, max_tile):
    """Pick (batch_tile, padded_B). Single step for small batches; >=128-row
    tiles otherwise so the MXU systolic array stays fed."""
    b8 = _round_up(max(B, 1), 8)
    if b8 <= 256:
        return b8, b8
    tile = max_tile
    while tile > 128 and b8 < 2 * tile:
        tile //= 2
    steps = -(-b8 // tile)
    # Even number of grid steps balances the v7x 2-TC megacore split; only do
    # it when the extra padded rows are modest (<= ~12.5%).
    if steps % 2 == 1 and tile * 8 <= b8:
        steps += 1
    return tile, steps * tile


# ---------------------------------------------------------------------------
# Wrapper: pad + cast weights once, return a jitted callable
# ---------------------------------------------------------------------------

def make_projection_mlp(params, *, compute_dtype=jnp.bfloat16, act_dtype=None,
                        gelu_approx=True, out_dtype=None, batch_tile=None):
    """Prepare (pad + cast ONCE) and return a jitted callable
    x:(B, in_dim) -> (B, out_dim).

    params: dict from init_params(); Linear weights pre-transposed to
    (in_features, out_features) so the kernel computes y = x @ W + b.
    NOTE: compute_dtype=bf16 (default) gives ~5e-2-level deviation from f32
    PyTorch; gelu_approx=True adds a further ~3e-3 deviation from nn.GELU().
    """
    compute_dtype = jnp.dtype(compute_dtype)
    in_dim = int(params["w1"].shape[0])
    out_dim = int(params["w3"].shape[1])
    in_pad = _round_up(in_dim, 128)
    out_pad = _round_up(out_dim, 128)
    act = jnp.dtype(act_dtype) if act_dtype is not None else _default_act_dtype(compute_dtype)

    def pad2(a, rows, cols, dtype):
        a = jnp.asarray(a, dtype)
        return jnp.pad(a, ((0, rows - a.shape[0]), (0, cols - a.shape[1])))

    # Weights stored/DMAed in compute_dtype (bf16 halves weight HBM/VMEM
    # traffic); bias + LayerNorm vectors stay f32. Padded regions are zero so
    # padded lanes remain exactly zero through every layer.
    weights = (
        pad2(params["w1"], in_pad, in_pad, compute_dtype),
        pad2(params["b1"], 1, in_pad, jnp.float32),
        pad2(params["g1"], 1, in_pad, jnp.float32),
        pad2(params["be1"], 1, in_pad, jnp.float32),
        pad2(params["w2"], in_pad, in_pad, compute_dtype),
        pad2(params["b2"], 1, in_pad, jnp.float32),
        pad2(params["g2"], 1, in_pad, jnp.float32),
        pad2(params["be2"], 1, in_pad, jnp.float32),
        pad2(params["w3"], in_pad, out_pad, compute_dtype),
        pad2(params["b3"], 1, out_pad, jnp.float32),
        pad2(params["g3"], 1, out_pad, jnp.float32),
        pad2(params["be3"], 1, out_pad, jnp.float32),
    )

    kernel = functools.partial(
        projection_mlp_kernel, n_hidden=in_dim, n_out=out_dim,
        compute_dtype=compute_dtype, act_dtype=act, gelu_approx=gelu_approx)

    single_buf = _single_buffer_supported()
    max_tile = _max_batch_tile()
    vmem_limit = _vmem_limit_bytes()

    # TODO(synk): for in_dim beyond ~3k the three bf16 weight matrices no
    # longer fit v7x's 64 MiB VMEM -- add a K/N-tiled inner pipeline
    # (pltpu.emit_pipeline over weight-column blocks) or split per layer.

    @jax.jit
    def apply(x, wts):
        assert x.ndim == 2 and x.shape[1] == in_dim
        B = x.shape[0]
        if batch_tile is not None:
            tile, b_pad = batch_tile, _round_up(B, batch_tile)
        else:
            tile, b_pad = _batch_tiling(B, max_tile)
        odt = jnp.dtype(out_dtype) if out_dtype is not None else x.dtype

        # x is DMA'd in compute_dtype (halves x HBM traffic + VMEM tile);
        # features / batch zero-padded to lane / tile multiples.
        xp = jnp.pad(x.astype(compute_dtype),
                     ((0, b_pad - B), (0, in_pad - in_dim)))

        def inv_spec(a):
            shp = a.shape
            idx = lambda i: (0,) * len(shp)          # grid-invariant operand
            if single_buf:
                # Single-buffer invariant operands: halves their VMEM
                # footprint (critical on v7x's 64 MiB VMEM).
                return pl.BlockSpec(shp, idx, pipeline_mode=pl.Buffered(1))
            return pl.BlockSpec(shp, idx)

        out = pl.pallas_call(
            kernel,
            out_shape=jax.ShapeDtypeStruct((b_pad, out_pad), odt),
            grid_spec=pltpu.PrefetchScalarGridSpec(
                num_scalar_prefetch=0,
                grid=(b_pad // tile,),
                in_specs=[pl.BlockSpec((tile, in_pad), lambda i: (i, 0))]
                         + [inv_spec(a) for a in wts],
                out_specs=pl.BlockSpec((tile, out_pad), lambda i: (i, 0)),
            ),
            compiler_params=pltpu.CompilerParams(
                dimension_semantics=("parallel",),
                vmem_limit_bytes=vmem_limit,
            ),
        )(xp, *wts)
        return out[:B, :out_dim]

    return lambda x: apply(x, weights)


# ---------------------------------------------------------------------------
# Synthetic init + pure-JAX reference (PyTorch semantics)
# ---------------------------------------------------------------------------

def init_params(key, in_dim, out_dim):
    """Deterministic synthetic init. Linear weights stored pre-transposed:
    (in_features, out_features). Bias/gamma/beta stored as (1, dim)."""
    ks = jax.random.split(key, 6)
    s = 1.0 / jnp.sqrt(in_dim)
    return {
        "w1": jax.random.uniform(ks[0], (in_dim, in_dim), jnp.float32, -s, s),
        "b1": jax.random.uniform(ks[1], (1, in_dim), jnp.float32, -s, s),
        "g1": jnp.ones((1, in_dim), jnp.float32),
        "be1": jnp.zeros((1, in_dim), jnp.float32),
        "w2": jax.random.uniform(ks[2], (in_dim, in_dim), jnp.float32, -s, s),
        "b2": jax.random.uniform(ks[3], (1, in_dim), jnp.float32, -s, s),
        "g2": jnp.ones((1, in_dim), jnp.float32),
        "be2": jnp.zeros((1, in_dim), jnp.float32),
        "w3": jax.random.uniform(ks[4], (in_dim, out_dim), jnp.float32, -s, s),
        "b3": jax.random.uniform(ks[5], (1, out_dim), jnp.float32, -s, s),
        "g3": jnp.ones((1, out_dim), jnp.float32),
        "be3": jnp.zeros((1, out_dim), jnp.float32),
    }


def reference_projection_mlp(x, p):
    """Pure-JAX f32 reference (matches PyTorch module semantics)."""
    def layer(h, w, b, g, be, gelu):
        y = h @ w + b
        mu = jnp.mean(y, axis=-1, keepdims=True)
        var = jnp.mean((y - mu) ** 2, axis=-1, keepdims=True)
        y = (y - mu) / jnp.sqrt(var + LN_EPS) * g + be
        if gelu:
            y = 0.5 * y * (1.0 + lax.erf(y / jnp.sqrt(2.0)))
        return y
    h = layer(x, p["w1"], p["b1"], p["g1"], p["be1"], True)
    h = layer(h, p["w2"], p["b2"], p["g2"], p["be2"], True)
    h = layer(h, p["w3"], p["b3"], p["g3"], p["be3"], False)
    return h


if __name__ == "__main__":
    key = jax.random.PRNGKey(0)
    k_x, k_p = jax.random.split(key)

    batch, in_dim, out_dim = 16, 32, 16
    x = jax.random.normal(k_x, (batch, in_dim), dtype=jnp.float32)
    params = init_params(k_p, in_dim, out_dim)

    ref = reference_projection_mlp(x, params)

    # Exact-precision path: f32 matmuls + erf GELU, forced 2-step batch grid.
    mlp_f32 = make_projection_mlp(params, compute_dtype=jnp.float32,
                                  gelu_approx=False, batch_tile=8)
    out_f32 = jax.block_until_ready(mlp_f32(x))
    assert out_f32.shape == (batch, out_dim)
    assert jnp.allclose(out_f32, ref, atol=2e-4, rtol=2e-4), "f32 path mismatch"

    # Default optimized path: bf16 x/weight DMAs + MXU matmuls with f32
    # accumulation, f32 LayerNorm, tanh-approx GELU (bf16 on v6e/v7x).
    mlp_fast = make_projection_mlp(params)
    out = jax.block_until_ready(mlp_fast(x))
    assert out.shape == (batch, out_dim)
    assert out.dtype == x.dtype
    assert jnp.allclose(out, ref, atol=5e-2, rtol=5e-2), "bf16 path mismatch"

    print("KERNEL_OK")
</pallas_src>

<mosaic_0001>
module attributes {stable_mosaic.version = 11 : i64} {
  func.func @k(%arg0: i32, %arg1: memref<8x128xf32, #tpu.memory_space<vmem>>, %arg2: memref<8x128xf32, #tpu.memory_space<vmem>>) attributes {dimension_semantics = [#tpu.dimension_semantics<arbitrary>], iteration_bounds = array<i64: 2>, scalar_prefetch = 0 : i64, scratch_operands = 0 : i64, tpu.core_type = #tpu.core_type<tc>, window_params = [{pipeline_mode = #tpu.pipeline_mode<synchronous>, transform_indices = @transform_0, window_bounds = array<i64: 8, 128>}, {pipeline_mode = #tpu.pipeline_mode<synchronous>, transform_indices = @transform_1, window_bounds = array<i64: 8, 128>}]} {
    %c0 = arith.constant 0 : index
    %c0_0 = arith.constant 0 : index
    %0 = vector.load %arg1[%c0, %c0_0] : memref<8x128xf32, #tpu.memory_space<vmem>>, vector<8x128xf32>
    %cst = arith.constant 1.000000e+00 : f32
    %1 = vector.broadcast %cst : f32 to vector<8x128xf32>
    %2 = arith.addf %0, %1 : vector<8x128xf32>
    %c0_1 = arith.constant 0 : index
    %c0_2 = arith.constant 0 : index
    %3 = vector.load %arg2[%c0_1, %c0_2] : memref<8x128xf32, #tpu.memory_space<vmem>>, vector<8x128xf32>
    tpu.vector_store %arg2[%c0_1, %c0_2], %2 {strides = array<i32>} : memref<8x128xf32, #tpu.memory_space<vmem>>, vector<8x128xf32>,
    return
  }
  func.func @transform_0(%arg0: i32) -> (i32, i32) {
    %c0_i32 = arith.constant 0 : i32
    %c0_i32_0 = arith.constant 0 : i32
    %c0_i32_1 = arith.constant 0 : i32
    return %c0_i32, %c0_i32_0 : i32, i32
  }
  func.func @transform_1(%arg0: i32) -> (i32, i32) {
    %c0_i32 = arith.constant 0 : i32
    %c0_i32_0 = arith.constant 0 : i32
    %c0_i32_1 = arith.constant 0 : i32
    return %c0_i32, %c0_i32_0 : i32, i32
  }
}

module attributes {stable_mosaic.version = 11 : i64} {
  func.func @projection_mlp_kernel(%arg0: i32, %arg1: memref<8x128xf32, #tpu.memory_space<vmem>>, %arg2: memref<128x128xf32, #tpu.memory_space<vmem>>, %arg3: memref<1x128xf32, #tpu.memory_space<vmem>>, %arg4: memref<1x128xf32, #tpu.memory_space<vmem>>, %arg5: memref<1x128xf32, #tpu.memory_space<vmem>>, %arg6: memref<128x128xf32, #tpu.memory_space<vmem>>, %arg7: memref<1x128xf32, #tpu.memory_space<vmem>>, %arg8: memref<1x128xf32, #tpu.memory_space<vmem>>, %arg9: memref<1x128xf32, #tpu.memory_space<vmem>>, %arg10: memref<128x128xf32, #tpu.memory_space<vmem>>, %arg11: memref<1x128xf32, #tpu.memory_space<vmem>>, %arg12: memref<1x128xf32, #tpu.memory_space<vmem>>, %arg13: memref<1x128xf32, #tpu.memory_space<vmem>>, %arg14: memref<8x128xf32, #tpu.memory_space<vmem>>) attributes {dimension_semantics = [#tpu.dimension_semantics<parallel>], iteration_bounds = array<i64: 2>, scalar_prefetch = 0 : i64, scratch_operands = 0 : i64, tpu.core_type = #tpu.core_type<tc>, window_params = [{transform_indices = @transform_0, window_bounds = array<i64: 8, 128>}, {pipeline_mode = #tpu.pipeline_mode<synchronous>, transform_indices = @transform_1, window_bounds = array<i64: 128, 128>}, {pipeline_mode = #tpu.pipeline_mode<synchronous>, transform_indices = @transform_2, window_bounds = array<i64: 1, 128>}, {pipeline_mode = #tpu.pipeline_mode<synchronous>, transform_indices = @transform_3, window_bounds = array<i64: 1, 128>}, {pipeline_mode = #tpu.pipeline_mode<synchronous>, transform_indices = @transform_4, window_bounds = array<i64: 1, 128>}, {pipeline_mode = #tpu.pipeline_mode<synchronous>, transform_indices = @transform_5, window_bounds = array<i64: 128, 128>}, {pipeline_mode = #tpu.pipeline_mode<synchronous>, transform_indices = @transform_6, window_bounds = array<i64: 1, 128>}, {pipeline_mode = #tpu.pipeline_mode<synchronous>, transform_indices = @transform_7, window_bounds = array<i64: 1, 128>}, {pipeline_mode = #tpu.pipeline_mode<synchronous>, transform_indices = @transform_8, window_bounds = array<i64: 1, 128>}, {pipeline_mode = #tpu.pipeline_mode<synchronous>, transform_indices = @transform_9, window_bounds = array<i64: 128, 128>}, {pipeline_mode = #tpu.pipeline_mode<synchronous>, transform_indices = @transform_10, window_bounds = array<i64: 1, 128>}, {pipeline_mode = #tpu.pipeline_mode<synchronous>, transform_indices = @transform_11, window_bounds = array<i64: 1, 128>}, {pipeline_mode = #tpu.pipeline_mode<synchronous>, transform_indices = @transform_12, window_bounds = array<i64: 1, 128>}, {transform_indices = @transform_13, window_bounds = array<i64: 8, 128>}]} {
    %c0 = arith.constant 0 : index
    %c0_0 = arith.constant 0 : index
    %0 = vector.load %arg1[%c0, %c0_0] : memref<8x128xf32, #tpu.memory_space<vmem>>, vector<8x128xf32>
    %c0_1 = arith.constant 0 : index
    %c0_2 = arith.constant 0 : index
    %1 = vector.load %arg2[%c0_1, %c0_2] : memref<128x128xf32, #tpu.memory_space<vmem>>, vector<128x128xf32>
    %c0_3 = arith.constant 0 : index
    %c0_4 = arith.constant 0 : index
    %2 = vector.load %arg3[%c0_3, %c0_4] : memref<1x128xf32, #tpu.memory_space<vmem>>, vector<1x128xf32>
    %c0_5 = arith.constant 0 : index
    %c0_6 = arith.constant 0 : index
    %3 = vector.load %arg4[%c0_5, %c0_6] : memref<1x128xf32, #tpu.memory_space<vmem>>, vector<1x128xf32>
    %c0_7 = arith.constant 0 : index
    %c0_8 = arith.constant 0 : index
    %4 = vector.load %arg5[%c0_7, %c0_8] : memref<1x128xf32, #tpu.memory_space<vmem>>, vector<1x128xf32>
    %cst = arith.constant dense<0.000000e+00> : vector<8x128xf32>
    %5 = tpu.matmul %0, %1, %cst {dimension_numbers = #tpu.dot_dimension_numbers<[1], [0], [0], [1], [0, 0, 1, 1], [], []>} : vector<8x128xf32>, vector<128x128xf32>, vector<8x128xf32> -> vector<8x128xf32>
    %6 = vector.broadcast %2 : vector<1x128xf32> to vector<8x128xf32>
    %7 = arith.addf %5, %6 : vector<8x128xf32>
    %cst_9 = arith.constant dense<0.000000e+00> : vector<8xf32>
    %8 = vector.multi_reduction <add>, %7, %cst_9 [1] : vector<8x128xf32> to vector<8xf32>
    %9 = vector.shape_cast %8 : vector<8xf32> to vector<8x1xf32>
    %cst_10 = arith.constant 3.125000e-02 : f32
    %10 = vector.broadcast %cst_10 : f32 to vector<8x1xf32>
    %11 = arith.mulf %9, %10 : vector<8x1xf32>
    %12 = arith.mulf %7, %7 : vector<8x128xf32>
    %cst_11 = arith.constant dense<0.000000e+00> : vector<8xf32>
    %13 = vector.multi_reduction <add>, %12, %cst_11 [1] : vector<8x128xf32> to vector<8xf32>
    %14 = vector.shape_cast %13 : vector<8xf32> to vector<8x1xf32>
    %cst_12 = arith.constant 3.125000e-02 : f32
    %15 = vector.broadcast %cst_12 : f32 to vector<8x1xf32>
    %16 = arith.mulf %14, %15 : vector<8x1xf32>
    %17 = arith.mulf %11, %11 : vector<8x1xf32>
    %18 = arith.subf %16, %17 : vector<8x1xf32>
    %cst_13 = arith.constant 0.000000e+00 : f32
    %19 = vector.broadcast %cst_13 : f32 to vector<8x1xf32>
    %20 = arith.maximumf %18, %19 : vector<8x1xf32>
    %21 = vector.broadcast %11 : vector<8x1xf32> to vector<8x128xf32>
    %22 = arith.subf %7, %21 : vector<8x128xf32>
    %cst_14 = arith.constant 9.99999974E-6 : f32
    %23 = vector.broadcast %cst_14 : f32 to vector<8x1xf32>
    %24 = arith.addf %20, %23 : vector<8x1xf32>
    %25 = math.rsqrt %24 : vector<8x1xf32>
    %26 = vector.broadcast %25 : vector<8x1xf32> to vector<8x128xf32>
    %27 = arith.mulf %22, %26 : vector<8x128xf32>
    %28 = vector.broadcast %3 : vector<1x128xf32> to vector<8x128xf32>
    %29 = arith.mulf %27, %28 : vector<8x128xf32>
    %30 = vector.broadcast %4 : vector<1x128xf32> to vector<8x128xf32>
    %31 = arith.addf %29, %30 : vector<8x128xf32>
    %cst_15 = arith.constant 5.000000e-01 : f32
    %32 = vector.broadcast %cst_15 : f32 to vector<8x128xf32>
    %33 = arith.mulf %32, %31 : vector<8x128xf32>
    %cst_16 = arith.constant 0.707106769 : f32
    %34 = vector.broadcast %cst_16 : f32 to vector<8x128xf32>
    %35 = arith.mulf %31, %34 : vector<8x128xf32>
    %36 = math.erf %35 : vector<8x128xf32>
    %cst_17 = arith.constant 1.000000e+00 : f32
    %37 = vector.broadcast %cst_17 : f32 to vector<8x128xf32>
    %38 = arith.addf %37, %36 : vector<8x128xf32>
    %39 = arith.mulf %33, %38 : vector<8x128xf32>
    %c0_18 = arith.constant 0 : index
    %c0_19 = arith.constant 0 : index
    %40 = vector.load %arg6[%c0_18, %c0_19] : memref<128x128xf32, #tpu.memory_space<vmem>>, vector<128x128xf32>
    %c0_20 = arith.constant 0 : index
    %c0_21 = arith.constant 0 : index
    %41 = vector.load %arg7[%c0_20, %c0_21] : memref<1x128xf32, #tpu.memory_space<vmem>>, vector<1x128xf32>
    %c0_22 = arith.constant 0 : index
    %c0_23 = arith.constant 0 : index
    %42 = vector.load %arg8[%c0_22, %c0_23] : memref<1x128xf32, #tpu.memory_space<vmem>>, vector<1x128xf32>
    %c0_24 = arith.constant 0 : index
    %c0_25 = arith.constant 0 : index
    %43 = vector.load %arg9[%c0_24, %c0_25] : memref<1x128xf32, #tpu.memory_space<vmem>>, vector<1x128xf32>
    %cst_26 = arith.constant dense<0.000000e+00> : vector<8x128xf32>
    %44 = tpu.matmul %39, %40, %cst_26 {dimension_numbers = #tpu.dot_dimension_numbers<[1], [0], [0], [1], [0, 0, 1, 1], [], []>} : vector<8x128xf32>, vector<128x128xf32>, vector<8x128xf32> -> vector<8x128xf32>
    %45 = vector.broadcast %41 : vector<1x128xf32> to vector<8x128xf32>
    %46 = arith.addf %44, %45 : vector<8x128xf32>
    %cst_27 = arith.constant dense<0.000000e+00> : vector<8xf32>
    %47 = vector.multi_reduction <add>, %46, %cst_27 [1] : vector<8x128xf32> to vector<8xf32>
    %48 = vector.shape_cast %47 : vector<8xf32> to vector<8x1xf32>
    %cst_28 = arith.constant 3.125000e-02 : f32
    %49 = vector.broadcast %cst_28 : f32 to vector<8x1xf32>
    %50 = arith.mulf %48, %49 : vector<8x1xf32>
    %51 = arith.mulf %46, %46 : vector<8x128xf32>
    %cst_29 = arith.constant dense<0.000000e+00> : vector<8xf32>
    %52 = vector.multi_reduction <add>, %51, %cst_29 [1] : vector<8x128xf32> to vector<8xf32>
    %53 = vector.shape_cast %52 : vector<8xf32> to vector<8x1xf32>
    %cst_30 = arith.constant 3.125000e-02 : f32
    %54 = vector.broadcast %cst_30 : f32 to vector<8x1xf32>
    %55 = arith.mulf %53, %54 : vector<8x1xf32>
    %56 = arith.mulf %50, %50 : vector<8x1xf32>
    %57 = arith.subf %55, %56 : vector<8x1xf32>
    %cst_31 = arith.constant 0.000000e+00 : f32
    %58 = vector.broadcast %cst_31 : f32 to vector<8x1xf32>
    %59 = arith.maximumf %57, %58 : vector<8x1xf32>
    %60 = vector.broadcast %50 : vector<8x1xf32> to vector<8x128xf32>
    %61 = arith.subf %46, %60 : vector<8x128xf32>
    %cst_32 = arith.constant 9.99999974E-6 : f32
    %62 = vector.broadcast %cst_32 : f32 to vector<8x1xf32>
    %63 = arith.addf %59, %62 : vector<8x1xf32>
    %64 = math.rsqrt %63 : vector<8x1xf32>
    %65 = vector.broadcast %64 : vector<8x1xf32> to vector<8x128xf32>
    %66 = arith.mulf %61, %65 : vector<8x128xf32>
    %67 = vector.broadcast %42 : vector<1x128xf32> to vector<8x128xf32>
    %68 = arith.mulf %66, %67 : vector<8x128xf32>
    %69 = vector.broadcast %43 : vector<1x128xf32> to vector<8x128xf32>
    %70 = arith.addf %68, %69 : vector<8x128xf32>
    %cst_33 = arith.constant 5.000000e-01 : f32
    %71 = vector.broadcast %cst_33 : f32 to vector<8x128xf32>
    %72 = arith.mulf %71, %70 : vector<8x128xf32>
    %cst_34 = arith.constant 0.707106769 : f32
    %73 = vector.broadcast %cst_34 : f32 to vector<8x128xf32>
    %74 = arith.mulf %70, %73 : vector<8x128xf32>
    %75 = math.erf %74 : vector<8x128xf32>
    %cst_35 = arith.constant 1.000000e+00 : f32
    %76 = vector.broadcast %cst_35 : f32 to vector<8x128xf32>
    %77 = arith.addf %76, %75 : vector<8x128xf32>
    %78 = arith.mulf %72, %77 : vector<8x128xf32>
    %c0_36 = arith.constant 0 : index
    %c0_37 = arith.constant 0 : index
    %79 = vector.load %arg10[%c0_36, %c0_37] : memref<128x128xf32, #tpu.memory_space<vmem>>, vector<128x128xf32>
    %c0_38 = arith.constant 0 : index
    %c0_39 = arith.constant 0 : index
    %80 = vector.load %arg11[%c0_38, %c0_39] : memref<1x128xf32, #tpu.memory_space<vmem>>, vector<1x128xf32>
    %c0_40 = arith.constant 0 : index
    %c0_41 = arith.constant 0 : index
    %81 = vector.load %arg12[%c0_40, %c0_41] : memref<1x128xf32, #tpu.memory_space<vmem>>, vector<1x128xf32>
    %c0_42 = arith.constant 0 : index
    %c0_43 = arith.constant 0 : index
    %82 = vector.load %arg13[%c0_42, %c0_43] : memref<1x128xf32, #tpu.memory_space<vmem>>, vector<1x128xf32>
    %cst_44 = arith.constant dense<0.000000e+00> : vector<8x128xf32>
    %83 = tpu.matmul %78, %79, %cst_44 {dimension_numbers = #tpu.dot_dimension_numbers<[1], [0], [0], [1], [0, 0, 1, 1], [], []>} : vector<8x128xf32>, vector<128x128xf32>, vector<8x128xf32> -> vector<8x128xf32>
    %84 = vector.broadcast %80 : vector<1x128xf32> to vector<8x128xf32>
    %85 = arith.addf %83, %84 : vector<8x128xf32>
    %cst_45 = arith.constant dense<0.000000e+00> : vector<8xf32>
    %86 = vector.multi_reduction <add>, %85, %cst_45 [1] : vector<8x128xf32> to vector<8xf32>
    %87 = vector.shape_cast %86 : vector<8xf32> to vector<8x1xf32>
    %cst_46 = arith.constant 6.250000e-02 : f32
    %88 = vector.broadcast %cst_46 : f32 to vector<8x1xf32>
    %89 = arith.mulf %87, %88 : vector<8x1xf32>
    %90 = arith.mulf %85, %85 : vector<8x128xf32>
    %cst_47 = arith.constant dense<0.000000e+00> : vector<8xf32>
    %91 = vector.multi_reduction <add>, %90, %cst_47 [1] : vector<8x128xf32> to vector<8xf32>
    %92 = vector.shape_cast %91 : vector<8xf32> to vector<8x1xf32>
    %cst_48 = arith.constant 6.250000e-02 : f32
    %93 = vector.broadcast %cst_48 : f32 to vector<8x1xf32>
    %94 = arith.mulf %92, %93 : vector<8x1xf32>
    %95 = arith.mulf %89, %89 : vector<8x1xf32>
    %96 = arith.subf %94, %95 : vector<8x1xf32>
    %cst_49 = arith.constant 0.000000e+00 : f32
    %97 = vector.broadcast %cst_49 : f32 to vector<8x1xf32>
    %98 = arith.maximumf %96, %97 : vector<8x1xf32>
    %99 = vector.broadcast %89 : vector<8x1xf32> to vector<8x128xf32>
    %100 = arith.subf %85, %99 : vector<8x128xf32>
    %cst_50 = arith.constant 9.99999974E-6 : f32
    %101 = vector.broadcast %cst_50 : f32 to vector<8x1xf32>
    %102 = arith.addf %98, %101 : vector<8x1xf32>
    %103 = math.rsqrt %102 : vector<8x1xf32>
    %104 = vector.broadcast %103 : vector<8x1xf32> to vector<8x128xf32>
    %105 = arith.mulf %100, %104 : vector<8x128xf32>
    %106 = vector.broadcast %81 : vector<1x128xf32> to vector<8x128xf32>
    %107 = arith.mulf %105, %106 : vector<8x128xf32>
    %108 = vector.broadcast %82 : vector<1x128xf32> to vector<8x128xf32>
    %109 = arith.addf %107, %108 : vector<8x128xf32>
    %c0_51 = arith.constant 0 : index
    %c0_52 = arith.constant 0 : index
    %110 = vector.load %arg14[%c0_51, %c0_52] : memref<8x128xf32, #tpu.memory_space<vmem>>, vector<8x128xf32>
    tpu.vector_store %arg14[%c0_51, %c0_52], %109 {strides = array<i32>} : memref<8x128xf32, #tpu.memory_space<vmem>>, vector<8x128xf32>,
    return
  }
  func.func @transform_0(%arg0: i32) -> (i32, i32) {
    %c0_i32 = arith.constant 0 : i32
    %c0_i32_0 = arith.constant 0 : i32
    return %arg0, %c0_i32 : i32, i32
  }
  func.func @transform_1(%arg0: i32) -> (i32, i32) {
    %c0_i32 = arith.constant 0 : i32
    %c0_i32_0 = arith.constant 0 : i32
    %c0_i32_1 = arith.constant 0 : i32
    return %c0_i32, %c0_i32_0 : i32, i32
  }
  func.func @transform_2(%arg0: i32) -> (i32, i32) {
    %c0_i32 = arith.constant 0 : i32
    %c0_i32_0 = arith.constant 0 : i32
    %c0_i32_1 = arith.constant 0 : i32
    return %c0_i32, %c0_i32_0 : i32, i32
  }
  func.func @transform_3(%arg0: i32) -> (i32, i32) {
    %c0_i32 = arith.constant 0 : i32
    %c0_i32_0 = arith.constant 0 : i32
    %c0_i32_1 = arith.constant 0 : i32
    return %c0_i32, %c0_i32_0 : i32, i32
  }
  func.func @transform_4(%arg0: i32) -> (i32, i32) {
    %c0_i32 = arith.constant 0 : i32
    %c0_i32_0 = arith.constant 0 : i32
    %c0_i32_1 = arith.constant 0 : i32
    return %c0_i32, %c0_i32_0 : i32, i32
  }
  func.func @transform_5(%arg0: i32) -> (i32, i32) {
    %c0_i32 = arith.constant 0 : i32
    %c0_i32_0 = arith.constant 0 : i32
    %c0_i32_1 = arith.constant 0 : i32
    return %c0_i32, %c0_i32_0 : i32, i32
  }
  func.func @transform_6(%arg0: i32) -> (i32, i32) {
    %c0_i32 = arith.constant 0 : i32
    %c0_i32_0 = arith.constant 0 : i32
    %c0_i32_1 = arith.constant 0 : i32
    return %c0_i32, %c0_i32_0 : i32, i32
  }
  func.func @transform_7(%arg0: i32) -> (i32, i32) {
    %c0_i32 = arith.constant 0 : i32
    %c0_i32_0 = arith.constant 0 : i32
    %c0_i32_1 = arith.constant 0 : i32
    return %c0_i32, %c0_i32_0 : i32, i32
  }
  func.func @transform_8(%arg0: i32) -> (i32, i32) {
    %c0_i32 = arith.constant 0 : i32
    %c0_i32_0 = arith.constant 0 : i32
    %c0_i32_1 = arith.constant 0 : i32
    return %c0_i32, %c0_i32_0 : i32, i32
  }
  func.func @transform_9(%arg0: i32) -> (i32, i32) {
    %c0_i32 = arith.constant 0 : i32
    %c0_i32_0 = arith.constant 0 : i32
    %c0_i32_1 = arith.constant 0 : i32
    return %c0_i32, %c0_i32_0 : i32, i32
  }
  func.func @transform_10(%arg0: i32) -> (i32, i32) {
    %c0_i32 = arith.constant 0 : i32
    %c0_i32_0 = arith.constant 0 : i32
    %c0_i32_1 = arith.constant 0 : i32
    return %c0_i32, %c0_i32_0 : i32, i32
  }
  func.func @transform_11(%arg0: i32) -> (i32, i32) {
    %c0_i32 = arith.constant 0 : i32
    %c0_i32_0 = arith.constant 0 : i32
    %c0_i32_1 = arith.constant 0 : i32
    return %c0_i32, %c0_i32_0 : i32, i32
  }
  func.func @transform_12(%arg0: i32) -> (i32, i32) {
    %c0_i32 = arith.constant 0 : i32
    %c0_i32_0 = arith.constant 0 : i32
    %c0_i32_1 = arith.constant 0 : i32
    return %c0_i32, %c0_i32_0 : i32, i32
  }
  func.func @transform_13(%arg0: i32) -> (i32, i32) {
    %c0_i32 = arith.constant 0 : i32
    %c0_i32_0 = arith.constant 0 : i32
    return %arg0, %c0_i32 : i32, i32
  }
}

</mosaic_0001>

<llo_original>
// kernel: tpu_custom_call.1
$region0: #{tpu_custom_call.1}
  #allocation0 [shape = 'u32[]', space=smem, size = 0x4, offset = 0x4, fixed_abs, tag = 'smem constant byte address 0x4 - core index']
  #allocation1 [shape = 'u32[144,128]{1,0:T(1,128)}', space=vmem, size = 0x12000, scoped, tag = 'internal scratch']
  %s0 = inlined_call_operand.hbm [shape: f32[8,128], index: 0, kind: input, shape index: {}]
  %s1 = inlined_call_operand.hbm [shape: f32[8,128], index: 1, kind: output, shape index: {}]
  %s2 = sld [smem:[#allocation0]]
  $region41: #{tpu_custom_call.1} parent=0
    _
  %s4 = ssub.s32 1, %s2
  %s5 = scalar_select 0, %s4, %s2
  $region1: #{tpu_custom_call.1} parent=0
    #allocation2 [shape = 'u8[4096]{0}', space=vmem, size = 0x1000, scoped, tag = 'input window, operand 0, single buffered']
    #allocation3 [shape = 's32[2]{0}', space=sflag, size = 0x8, scoped, tag = 'scoped memory for tpu_custom_call.1']
    #allocation4 [shape = 's32[2]{0}', space=sflag, size = 0x8, scoped, tag = 'scoped memory for tpu_custom_call.1']
    #allocation5 [shape = 'u8[4096]{0}', space=vmem, size = 0x1000, scoped, tag = 'output window, operand 0, single buffered']
    %6 = vsyncpa [#allocation3], 0
    %7 = vsyncpa [#allocation4], 0
    loop: start=0, step=1, limit=4
    $region2: #{tpu_custom_call.1} parent=1 // loop_pre_header
      _
    $region3: #{tpu_custom_call.1} parent=1 // loop_header
      %s9 = sphi 0, %s13
      %p10 = scmp.ge.s32.totalorder %s9, 4
      %s17 = sphi 0, %s17
      %s19 = sphi 0, %s17
      %s20 = sphi 0, %s19
      %s34 = sphi 0, %s20
      %s38 = sphi 0, %s38
      %s40 = sphi 0, %s38
      %s41 = sphi 0, %s40
      %s55 = sphi 0, %s41
    $region4: #{tpu_custom_call.1} parent=1 // loop_header_branch
      %12 = sbr.rel (%p10) target = $region8
    $region5: #{tpu_custom_call.1} parent=1 // loop_body
      %s14 = ssub.s32 %s9, 1
      %s15 = ssub.s32 %s9, 2
      %s16 = sadd.s32 %s9, 1
      %s18 = sadd.s32 %s17, 1
      %p21 = scmp.eq.s32.totalorder %s9, 1
      %p22 = scmp.ne.s32.totalorder %s17, %s19
      %p23 = scmp.eq.s32.totalorder %s9, 0
      %p24 = por %p22, %p23
      %p25 = scmp.ne.s32.totalorder %s17, %s19
      %p26 = scmp.eq.s32.totalorder %s14, 1
      %p27 = por %p25, %p26
      %p28 = scmp.ne.s32.totalorder %s19, %s20
      %p29 = scmp.eq.s32.totalorder %s14, 0
      %p30 = por %p28, %p29
      %p31 = scmp.ne.s32.totalorder %s19, %s20
      %p32 = scmp.eq.s32.totalorder %s15, 1
      %p33 = por %p31, %p32
      %p35 = scmp.ne.s32.totalorder %s20, %s34
      %p36 = scmp.eq.s32.totalorder %s15, 0
      %p37 = por %p35, %p36
      %s39 = sadd.s32 %s38, 1
      %p42 = scmp.eq.s32.totalorder %s9, 1
      %p43 = scmp.ne.s32.totalorder %s38, %s40
      %p44 = scmp.eq.s32.totalorder %s9, 0
      %p45 = por %p43, %p44
      %p46 = scmp.ne.s32.totalorder %s38, %s40
      %p47 = scmp.eq.s32.totalorder %s14, 1
      %p48 = por %p46, %p47
      %p49 = scmp.ne.s32.totalorder %s40, %s41
      %p50 = scmp.eq.s32.totalorder %s14, 0
      %p51 = por %p49, %p50
      %p52 = scmp.ne.s32.totalorder %s40, %s41
      %p53 = scmp.eq.s32.totalorder %s15, 1
      %p54 = por %p52, %p53
      %p56 = scmp.ne.s32.totalorder %s41, %s55
      %p57 = scmp.eq.s32.totalorder %s15, 0
      %p58 = por %p56, %p57
      %p59 = scmp.le.s32.totalorder 1, %s9
      %p60 = scmp.lt.s32.totalorder %s9, 3
      %p61 = pnand %p59, %p60
      %p62 = pneg %p61
      // Predicated region
      $region9: #{tpu_custom_call.1} parent=5 // pred_check
        _
      $region10: #{tpu_custom_call.1} parent=5 // pred_check_branch
        %64 = sbr.rel (%p61) target = $region12
      $region11: #{tpu_custom_call.1} parent=5 // pred_region
        %s65 = ssub.s32 %s9, 1
        // Predicated region
        $region13: #{tpu_custom_call.1} parent=11 // pred_check
          %p66 = pneg %p30
        $region14: #{tpu_custom_call.1} parent=11 // pred_check_branch
          %68 = sbr.rel (%p66) target = $region16
        $region15: #{tpu_custom_call.1} parent=11 // pred_region
          %s70 = ssub.s32 128, 128
          %71 = vsyncadd [#allocation3], %s70
          %s73 = sshll.u32 [#allocation2], 4
          %s74 = int_to_ptr.vmem [resolvable:$true] %s73
          %76 = dma.hbm_to_vmem [thread:$0]  %s0, 128, %s74, [#allocation3]
        $region16: #{tpu_custom_call.1} parent=11 // pred_fallthru
          _
      $region12: #{tpu_custom_call.1} parent=5 // pred_fallthru
        _
      %p77 = scmp.lt.s32.totalorder %s9, 2
      // Predicated region
      $region17: #{tpu_custom_call.1} parent=5 // pred_check
        %p78 = pneg %p77
      $region18: #{tpu_custom_call.1} parent=5 // pred_check_branch
        %80 = sbr.rel (%p78) target = $region20
      $region19: #{tpu_custom_call.1} parent=5 // pred_region
        _
      $region20: #{tpu_custom_call.1} parent=5 // pred_fallthru
        _
      %p81 = scmp.le.s32.totalorder 1, %s9
      %p82 = scmp.lt.s32.totalorder %s9, 3
      %p83 = pnand %p81, %p82
      %p84 = pneg %p83
      // Predicated region
      $region21: #{tpu_custom_call.1} parent=5 // pred_check
        _
      $region22: #{tpu_custom_call.1} parent=5 // pred_check_branch
        %86 = sbr.rel (%p83) target = $region24
      $region23: #{tpu_custom_call.1} parent=5 // pred_region
        %s87 = ssub.s32 %s9, 1
        // Predicated region
        $region25: #{tpu_custom_call.1} parent=23 // pred_check
          %p88 = pneg %p30
        $region26: #{tpu_custom_call.1} parent=23 // pred_check_branch
          %90 = sbr.rel (%p88) target = $region28
        $region27: #{tpu_custom_call.1} parent=23 // pred_region
          %91 = dma.done [#allocation3], 128
        $region28: #{tpu_custom_call.1} parent=23 // pred_fallthru
          _
        %p92 = pneg %p30
        %p93 = pneg %p27
        %p94 = pneg %p51
        %p95 = pneg %p48
        %v96 = vld [vmem:[#allocation2] sm:$0xff]
        %v97 = vadd.f32 %v96, 1.0
        %98 = vst [vmem:[#allocation5] sm:$0xff] %v97
        // Predicated region
        $region29: #{tpu_custom_call.1} parent=23 // pred_check
          %p99 = pneg %p48
        $region30: #{tpu_custom_call.1} parent=23 // pred_check_branch
          %101 = sbr.rel (%p99) target = $region32
        $region31: #{tpu_custom_call.1} parent=23 // pred_region
          %s103 = ssub.s32 128, 128
          %104 = vsyncadd [#allocation4], %s103
          %s106 = sshll.u32 [#allocation5], 4
          %s107 = int_to_ptr.vmem [resolvable:$true] %s106
          %109 = dma.vmem_to_hbm [thread:$0]  %s107, 128, %s1, [#allocation4]
        $region32: #{tpu_custom_call.1} parent=23 // pred_fallthru
          _
        // Predicated region
        $region33: #{tpu_custom_call.1} parent=23 // pred_check
          %p110 = pneg %p48
        $region34: #{tpu_custom_call.1} parent=23 // pred_check_branch
          %112 = sbr.rel (%p110) target = $region36
        $region35: #{tpu_custom_call.1} parent=23 // pred_region
          %113 = dma.done [#allocation4], 128
        $region36: #{tpu_custom_call.1} parent=23 // pred_fallthru
          _
      $region24: #{tpu_custom_call.1} parent=5 // pred_fallthru
        _
      %p114 = scmp.le.s32.totalorder 2, %s9
      // Predicated region
      $region37: #{tpu_custom_call.1} parent=5 // pred_check
        %p115 = pneg %p114
      $region38: #{tpu_custom_call.1} parent=5 // pred_check_branch
        %117 = sbr.rel (%p115) target = $region40
      $region39: #{tpu_custom_call.1} parent=5 // pred_region
        %s118 = ssub.s32 %s9, 2
      $region40: #{tpu_custom_call.1} parent=5 // pred_fallthru
        _
    $region6: #{tpu_custom_call.1} parent=1 // loop_footer
      %s13 = sadd.s32 1, %s9
    $region7: #{tpu_custom_call.1} parent=1 // loop_footer_branch
      %8 = sbr.rel target = $region3
    $region8: #{tpu_custom_call.1} parent=1 // loop_exit
      _
    %119 = vsyncpa [#allocation3], 1
    %s120 = scalar_lea.sflag [#allocation3], 1
    %121 = vsyncpa %s120, 1
    %122 = vsyncpa [#allocation4], 1
    %s123 = scalar_lea.sflag [#allocation4], 1
    %124 = vsyncpa %s123, 1

// kernel: apply.1
$region0: #{apply.1}
  #allocation0 [shape = 'u32[]', space=smem, size = 0x4, offset = 0x4, fixed_abs, tag = 'smem constant byte address 0x4 - core index']
  #allocation1 [shape = 'u32[144,128]{1,0:T(1,128)}', space=vmem, size = 0x12000, scoped, tag = 'internal scratch']
  %s0 = inlined_call_operand.vmem [shape: f32[16,128], index: 0, kind: input, shape index: {}]
  %s1 = inlined_call_operand.hbm [shape: f32[128,128], index: 1, kind: input, shape index: {}]
  %s2 = inlined_call_operand.vmem [shape: f32[1,128], index: 2, kind: input, shape index: {}]
  %s3 = inlined_call_operand.vmem [shape: f32[1,128], index: 3, kind: input, shape index: {}]
  %s4 = inlined_call_operand.vmem [shape: f32[1,128], index: 4, kind: input, shape index: {}]
  %s5 = inlined_call_operand.hbm [shape: f32[128,128], index: 5, kind: input, shape index: {}]
  %s6 = inlined_call_operand.vmem [shape: f32[1,128], index: 6, kind: input, shape index: {}]
  %s7 = inlined_call_operand.vmem [shape: f32[1,128], index: 7, kind: input, shape index: {}]
  %s8 = inlined_call_operand.vmem [shape: f32[1,128], index: 8, kind: input, shape index: {}]
  %s9 = inlined_call_operand.hbm [shape: f32[128,128], index: 9, kind: input, shape index: {}]
  %s10 = inlined_call_operand.vmem [shape: f32[1,128], index: 10, kind: input, shape index: {}]
  %s11 = inlined_call_operand.vmem [shape: f32[1,128], index: 11, kind: input, shape index: {}]
  %s12 = inlined_call_operand.vmem [shape: f32[1,128], index: 12, kind: input, shape index: {}]
  %s13 = inlined_call_operand.hbm [shape: f32[16,128], index: 13, kind: output, shape index: {}]
  %s14 = sld [smem:[#allocation0]]
  $region97: #{apply.1} parent=0
    _
  %s16 = ssub.s32 1, %s14
  %s17 = scalar_select 0, %s16, %s14
  $region1: #{apply.1} parent=0
    #allocation2 [shape = 'u8[65536]{0}', space=vmem, size = 0x10000, scoped, tag = 'input window, operand 1, single buffered']
    #allocation3 [shape = 's32[2]{0}', space=sflag, size = 0x8, scoped, tag = 'scoped memory for apply.1']
    #allocation4 [shape = 's32[2]{0}', space=sflag, size = 0x8, scoped, tag = 'scoped memory for apply.1']
    #allocation5 [shape = 'u8[65536]{0}', space=vmem, size = 0x10000, scoped, tag = 'input window, operand 5, single buffered']
    #allocation6 [shape = 's32[1]{0}', space=sflag, size = 0x4, scoped, tag = 'scoped memory for apply.1']
    #allocation7 [shape = 'u8[65536]{0}', space=vmem, size = 0x10000, scoped, tag = 'input window, operand 9, single buffered']
    #allocation8 [shape = 'u8[8192]{0}', space=vmem, size = 0x2000, scoped, tag = 'output window, operand 0']
    %18 = vsyncpa [#allocation3], 0
    %19 = vsyncpa [#allocation6], 0
    %20 = vsyncpa [#allocation4], 0
    %s21 = scalar_lea.sflag [#allocation4], 1
    %22 = vsyncpa %s21, 0
    loop: start=0, step=1, limit=4
    $region2: #{apply.1} parent=1 // loop_pre_header
      _
    $region3: #{apply.1} parent=1 // loop_header
      %s24 = sphi 0, %s28
      %p25 = scmp.ge.s32.totalorder %s24, 4
      %s34 = sphi 0, %s36
      %s37 = sphi 0, %s34
      %s38 = sphi 0, %s37
      %s54 = sphi 0, %s38
      %s58 = sphi 0, %s58
      %s60 = sphi 0, %s58
      %s61 = sphi 0, %s60
      %s75 = sphi 0, %s61
      %s79 = sphi 0, %s79
      %s81 = sphi 0, %s79
      %s82 = sphi 0, %s81
      %s96 = sphi 0, %s82
      %s100 = sphi 0, %s100
      %s102 = sphi 0, %s100
      %s103 = sphi 0, %s102
      %s117 = sphi 0, %s103
      %s121 = sphi 0, %s121
      %s123 = sphi 0, %s121
      %s124 = sphi 0, %s123
      %s138 = sphi 0, %s124
      %s142 = sphi 0, %s142
      %s144 = sphi 0, %s142
      %s145 = sphi 0, %s144
      %s159 = sphi 0, %s145
      %s163 = sphi 0, %s163
      %s165 = sphi 0, %s163
      %s166 = sphi 0, %s165
      %s180 = sphi 0, %s166
      %s184 = sphi 0, %s184
      %s186 = sphi 0, %s184
      %s187 = sphi 0, %s186
      %s201 = sphi 0, %s187
      %s205 = sphi 0, %s205
      %s207 = sphi 0, %s205
      %s208 = sphi 0, %s207
      %s222 = sphi 0, %s208
      %s226 = sphi 0, %s226
      %s228 = sphi 0, %s226
      %s229 = sphi 0, %s228
      %s243 = sphi 0, %s229
      %s247 = sphi 0, %s247
      %s249 = sphi 0, %s247
      %s250 = sphi 0, %s249
      %s264 = sphi 0, %s250
      %s268 = sphi 0, %s268
      %s270 = sphi 0, %s268
      %s271 = sphi 0, %s270
      %s285 = sphi 0, %s271
      %s289 = sphi 0, %s289
      %s291 = sphi 0, %s289
      %s292 = sphi 0, %s291
      %s306 = sphi 0, %s292
      %s312 = sphi 0, %s314
      %s315 = sphi 0, %s312
      %s316 = sphi 0, %s315
      %s332 = sphi 0, %s316
    $region4: #{apply.1} parent=1 // loop_header_branch
      %27 = sbr.rel (%p25) target = $region8
    $region5: #{apply.1} parent=1 // loop_body
      %s29 = ssub.s32 %s24, 1
      %s30 = ssub.s32 %s24, 2
      %s31 = sadd.s32 %s24, 1
      %s32 = ssub.s32 %s24, %s31
      %p33 = scmp.eq.s32.totalorder %s32, 0
      %s35 = sadd.s32 %s34, 1
      %s36 = scalar_select %p33, %s34, %s35
      %p39 = pneg %p33
      %p40 = scmp.eq.s32.totalorder %s24, 1
      %p41 = por %p39, %p40
      %p42 = scmp.ne.s32.totalorder %s34, %s37
      %p43 = scmp.eq.s32.totalorder %s24, 0
      %p44 = por %p42, %p43
      %p45 = scmp.ne.s32.totalorder %s34, %s37
      %p46 = scmp.eq.s32.totalorder %s29, 1
      %p47 = por %p45, %p46
      %p48 = scmp.ne.s32.totalorder %s37, %s38
      %p49 = scmp.eq.s32.totalorder %s29, 0
      %p50 = por %p48, %p49
      %p51 = scmp.ne.s32.totalorder %s37, %s38
      %p52 = scmp.eq.s32.totalorder %s30, 1
      %p53 = por %p51, %p52
      %p55 = scmp.ne.s32.totalorder %s38, %s54
      %p56 = scmp.eq.s32.totalorder %s30, 0
      %p57 = por %p55, %p56
      %s59 = sadd.s32 %s58, 1
      %p62 = scmp.eq.s32.totalorder %s24, 1
      %p63 = scmp.ne.s32.totalorder %s58, %s60
      %p64 = scmp.eq.s32.totalorder %s24, 0
      %p65 = por %p63, %p64
      %p66 = scmp.ne.s32.totalorder %s58, %s60
      %p67 = scmp.eq.s32.totalorder %s29, 1
      %p68 = por %p66, %p67
      %p69 = scmp.ne.s32.totalorder %s60, %s61
      %p70 = scmp.eq.s32.totalorder %s29, 0
      %p71 = por %p69, %p70
      %p72 = scmp.ne.s32.totalorder %s60, %s61
      %p73 = scmp.eq.s32.totalorder %s30, 1
      %p74 = por %p72, %p73
      %p76 = scmp.ne.s32.totalorder %s61, %s75
      %p77 = scmp.eq.s32.totalorder %s30, 0
      %p78 = por %p76, %p77
      %s80 = sadd.s32 %s79, 1
      %p83 = scmp.eq.s32.totalorder %s24, 1
      %p84 = scmp.ne.s32.totalorder %s79, %s81
      %p85 = scmp.eq.s32.totalorder %s24, 0
      %p86 = por %p84, %p85
      %p87 = scmp.ne.s32.totalorder %s79, %s81
      %p88 = scmp.eq.s32.totalorder %s29, 1
      %p89 = por %p87, %p88
      %p90 = scmp.ne.s32.totalorder %s81, %s82
      %p91 = scmp.eq.s32.totalorder %s29, 0
      %p92 = por %p90, %p91
      %p93 = scmp.ne.s32.totalorder %s81, %s82
      %p94 = scmp.eq.s32.totalorder %s30, 1
      %p95 = por %p93, %p94
      %p97 = scmp.ne.s32.totalorder %s82, %s96
      %p98 = scmp.eq.s32.totalorder %s30, 0
      %p99 = por %p97, %p98
      %s101 = sadd.s32 %s100, 1
      %p104 = scmp.eq.s32.totalorder %s24, 1
      %p105 = scmp.ne.s32.totalorder %s100, %s102
      %p106 = scmp.eq.s32.totalorder %s24, 0
      %p107 = por %p105, %p106
      %p108 = scmp.ne.s32.totalorder %s100, %s102
      %p109 = scmp.eq.s32.totalorder %s29, 1
      %p110 = por %p108, %p109
      %p111 = scmp.ne.s32.totalorder %s102, %s103
      %p112 = scmp.eq.s32.totalorder %s29, 0
      %p113 = por %p111, %p112
      %p114 = scmp.ne.s32.totalorder %s102, %s103
      %p115 = scmp.eq.s32.totalorder %s30, 1
      %p116 = por %p114, %p115
      %p118 = scmp.ne.s32.totalorder %s103, %s117
      %p119 = scmp.eq.s32.totalorder %s30, 0
      %p120 = por %p118, %p119
      %s122 = sadd.s32 %s121, 1
      %p125 = scmp.eq.s32.totalorder %s24, 1
      %p126 = scmp.ne.s32.totalorder %s121, %s123
      %p127 = scmp.eq.s32.totalorder %s24, 0
      %p128 = por %p126, %p127
      %p129 = scmp.ne.s32.totalorder %s121, %s123
      %p130 = scmp.eq.s32.totalorder %s29, 1
      %p131 = por %p129, %p130
      %p132 = scmp.ne.s32.totalorder %s123, %s124
      %p133 = scmp.eq.s32.totalorder %s29, 0
      %p134 = por %p132, %p133
      %p135 = scmp.ne.s32.totalorder %s123, %s124
      %p136 = scmp.eq.s32.totalorder %s30, 1
      %p137 = por %p135, %p136
      %p139 = scmp.ne.s32.totalorder %s124, %s138
      %p140 = scmp.eq.s32.totalorder %s30, 0
      %p141 = por %p139, %p140
      %s143 = sadd.s32 %s142, 1
      %p146 = scmp.eq.s32.totalorder %s24, 1
      %p147 = scmp.ne.s32.totalorder %s142, %s144
      %p148 = scmp.eq.s32.totalorder %s24, 0
      %p149 = por %p147, %p148
      %p150 = scmp.ne.s32.totalorder %s142, %s144
      %p151 = scmp.eq.s32.totalorder %s29, 1
      %p152 = por %p150, %p151
      %p153 = scmp.ne.s32.totalorder %s144, %s145
      %p154 = scmp.eq.s32.totalorder %s29, 0
      %p155 = por %p153, %p154
      %p156 = scmp.ne.s32.totalorder %s144, %s145
      %p157 = scmp.eq.s32.totalorder %s30, 1
      %p158 = por %p156, %p157
      %p160 = scmp.ne.s32.totalorder %s145, %s159
      %p161 = scmp.eq.s32.totalorder %s30, 0
      %p162 = por %p160, %p161
      %s164 = sadd.s32 %s163, 1
      %p167 = scmp.eq.s32.totalorder %s24, 1
      %p168 = scmp.ne.s32.totalorder %s163, %s165
      %p169 = scmp.eq.s32.totalorder %s24, 0
      %p170 = por %p168, %p169
      %p171 = scmp.ne.s32.totalorder %s163, %s165
      %p172 = scmp.eq.s32.totalorder %s29, 1
      %p173 = por %p171, %p172
      %p174 = scmp.ne.s32.totalorder %s165, %s166
      %p175 = scmp.eq.s32.totalorder %s29, 0
      %p176 = por %p174, %p175
      %p177 = scmp.ne.s32.totalorder %s165, %s166
      %p178 = scmp.eq.s32.totalorder %s30, 1
      %p179 = por %p177, %p178
      %p181 = scmp.ne.s32.totalorder %s166, %s180
      %p182 = scmp.eq.s32.totalorder %s30, 0
      %p183 = por %p181, %p182
      %s185 = sadd.s32 %s184, 1
      %p188 = scmp.eq.s32.totalorder %s24, 1
      %p189 = scmp.ne.s32.totalorder %s184, %s186
      %p190 = scmp.eq.s32.totalorder %s24, 0
      %p191 = por %p189, %p190
      %p192 = scmp.ne.s32.totalorder %s184, %s186
      %p193 = scmp.eq.s32.totalorder %s29, 1
      %p194 = por %p192, %p193
      %p195 = scmp.ne.s32.totalorder %s186, %s187
      %p196 = scmp.eq.s32.totalorder %s29, 0
      %p197 = por %p195, %p196
      %p198 = scmp.ne.s32.totalorder %s186, %s187
      %p199 = scmp.eq.s32.totalorder %s30, 1
      %p200 = por %p198, %p199
      %p202 = scmp.ne.s32.totalorder %s187, %s201
      %p203 = scmp.eq.s32.totalorder %s30, 0
      %p204 = por %p202, %p203
      %s206 = sadd.s32 %s205, 1
      %p209 = scmp.eq.s32.totalorder %s24, 1
      %p210 = scmp.ne.s32.totalorder %s205, %s207
      %p211 = scmp.eq.s32.totalorder %s24, 0
      %p212 = por %p210, %p211
      %p213 = scmp.ne.s32.totalorder %s205, %s207
      %p214 = scmp.eq.s32.totalorder %s29, 1
      %p215 = por %p213, %p214
      %p216 = scmp.ne.s32.totalorder %s207, %s208
      %p217 = scmp.eq.s32.totalorder %s29, 0
      %p218 = por %p216, %p217
      %p219 = scmp.ne.s32.totalorder %s207, %s208
      %p220 = scmp.eq.s32.totalorder %s30, 1
      %p221 = por %p219, %p220
      %p223 = scmp.ne.s32.totalorder %s208, %s222
      %p224 = scmp.eq.s32.totalorder %s30, 0
      %p225 = por %p223, %p224
      %s227 = sadd.s32 %s226, 1
      %p230 = scmp.eq.s32.totalorder %s24, 1
      %p231 = scmp.ne.s32.totalorder %s226, %s228
      %p232 = scmp.eq.s32.totalorder %s24, 0
      %p233 = por %p231, %p232
      %p234 = scmp.ne.s32.totalorder %s226, %s228
      %p235 = scmp.eq.s32.totalorder %s29, 1
      %p236 = por %p234, %p235
      %p237 = scmp.ne.s32.totalorder %s228, %s229
      %p238 = scmp.eq.s32.totalorder %s29, 0
      %p239 = por %p237, %p238
      %p240 = scmp.ne.s32.totalorder %s228, %s229
      %p241 = scmp.eq.s32.totalorder %s30, 1
      %p242 = por %p240, %p241
      %p244 = scmp.ne.s32.totalorder %s229, %s243
      %p245 = scmp.eq.s32.totalorder %s30, 0
      %p246 = por %p244, %p245
      %s248 = sadd.s32 %s247, 1
      %p251 = scmp.eq.s32.totalorder %s24, 1
      %p252 = scmp.ne.s32.totalorder %s247, %s249
      %p253 = scmp.eq.s32.totalorder %s24, 0
      %p254 = por %p252, %p253
      %p255 = scmp.ne.s32.totalorder %s247, %s249
      %p256 = scmp.eq.s32.totalorder %s29, 1
      %p257 = por %p255, %p256
      %p258 = scmp.ne.s32.totalorder %s249, %s250
      %p259 = scmp.eq.s32.totalorder %s29, 0
      %p260 = por %p258, %p259
      %p261 = scmp.ne.s32.totalorder %s249, %s250
      %p262 = scmp.eq.s32.totalorder %s30, 1
      %p263 = por %p261, %p262
      %p265 = scmp.ne.s32.totalorder %s250, %s264
      %p266 = scmp.eq.s32.totalorder %s30, 0
      %p267 = por %p265, %p266
      %s269 = sadd.s32 %s268, 1
      %p272 = scmp.eq.s32.totalorder %s24, 1
      %p273 = scmp.ne.s32.totalorder %s268, %s270
      %p274 = scmp.eq.s32.totalorder %s24, 0
      %p275 = por %p273, %p274
      %p276 = scmp.ne.s32.totalorder %s268, %s270
      %p277 = scmp.eq.s32.totalorder %s29, 1
      %p278 = por %p276, %p277
      %p279 = scmp.ne.s32.totalorder %s270, %s271
      %p280 = scmp.eq.s32.totalorder %s29, 0
      %p281 = por %p279, %p280
      %p282 = scmp.ne.s32.totalorder %s270, %s271
      %p283 = scmp.eq.s32.totalorder %s30, 1
      %p284 = por %p282, %p283
      %p286 = scmp.ne.s32.totalorder %s271, %s285
      %p287 = scmp.eq.s32.totalorder %s30, 0
      %p288 = por %p286, %p287
      %s290 = sadd.s32 %s289, 1
      %p293 = scmp.eq.s32.totalorder %s24, 1
      %p294 = scmp.ne.s32.totalorder %s289, %s291
      %p295 = scmp.eq.s32.totalorder %s24, 0
      %p296 = por %p294, %p295
      %p297 = scmp.ne.s32.totalorder %s289, %s291
      %p298 = scmp.eq.s32.totalorder %s29, 1
      %p299 = por %p297, %p298
      %p300 = scmp.ne.s32.totalorder %s291, %s292
      %p301 = scmp.eq.s32.totalorder %s29, 0
      %p302 = por %p300, %p301
      %p303 = scmp.ne.s32.totalorder %s291, %s292
      %p304 = scmp.eq.s32.totalorder %s30, 1
      %p305 = por %p303, %p304
      %p307 = scmp.ne.s32.totalorder %s292, %s306
      %p308 = scmp.eq.s32.totalorder %s30, 0
      %p309 = por %p307, %p308
      %s310 = ssub.s32 %s24, %s31
      %p311 = scmp.eq.s32.totalorder %s310, 0
      %s313 = sadd.s32 %s312, 1
      %s314 = scalar_select %p311, %s312, %s313
      %p317 = pneg %p311
      %p318 = scmp.eq.s32.totalorder %s24, 1
      %p319 = por %p317, %p318
      %p320 = scmp.ne.s32.totalorder %s312, %s315
      %p321 = scmp.eq.s32.totalorder %s24, 0
      %p322 = por %p320, %p321
      %p323 = scmp.ne.s32.totalorder %s312, %s315
      %p324 = scmp.eq.s32.totalorder %s29, 1
      %p325 = por %p323, %p324
      %p326 = scmp.ne.s32.totalorder %s315, %s316
      %p327 = scmp.eq.s32.totalorder %s29, 0
      %p328 = por %p326, %p327
      %p329 = scmp.ne.s32.totalorder %s315, %s316
      %p330 = scmp.eq.s32.totalorder %s30, 1
      %p331 = por %p329, %p330
      %p333 = scmp.ne.s32.totalorder %s316, %s332
      %p334 = scmp.eq.s32.totalorder %s30, 0
      %p335 = por %p333, %p334
      %p336 = scmp.le.s32.totalorder 1, %s24
      %p337 = scmp.lt.s32.totalorder %s24, 3
      %p338 = pnand %p336, %p337
      %p339 = pneg %p338
      // Predicated region
      $region9: #{apply.1} parent=5 // pred_check
        _
      $region10: #{apply.1} parent=5 // pred_check_branch
        %341 = sbr.rel (%p338) target = $region12
      $region11: #{apply.1} parent=5 // pred_region
        %s342 = ssub.s32 %s24, 1
        // Predicated region
        $region13: #{apply.1} parent=11 // pred_check
          %p343 = pneg %p71
        $region14: #{apply.1} parent=11 // pred_check_branch
          %345 = sbr.rel (%p343) target = $region16
        $region15: #{apply.1} parent=11 // pred_region
          %s347 = ssub.s32 2048, 2048
          %348 = vsyncadd [#allocation3], %s347
          %s349 = sshll.u32 [#allocation2], 4
          %s350 = int_to_ptr.vmem [resolvable:$true] %s349
          %355 = dma.hbm_to_vmem [thread:$0]  %s1, 2048, %s350, [#allocation3], 128, 128, 8
        $region16: #{apply.1} parent=11 // pred_fallthru
          _
        // Predicated region
        $region17: #{apply.1} parent=11 // pred_check
          %p356 = pneg %p92
        $region18: #{apply.1} parent=11 // pred_check_branch
          %358 = sbr.rel (%p356) target = $region20
        $region19: #{apply.1} parent=11 // pred_region
          _
        $region20: #{apply.1} parent=11 // pred_fallthru
          _
        // Predicated region
        $region21: #{apply.1} parent=11 // pred_check
          %p359 = pneg %p113
        $region22: #{apply.1} parent=11 // pred_check_branch
          %361 = sbr.rel (%p359) target = $region24
        $region23: #{apply.1} parent=11 // pred_region
          _
        $region24: #{apply.1} parent=11 // pred_fallthru
          _
        // Predicated region
        $region25: #{apply.1} parent=11 // pred_check
          %p362 = pneg %p134
        $region26: #{apply.1} parent=11 // pred_check_branch
          %364 = sbr.rel (%p362) target = $region28
        $region27: #{apply.1} parent=11 // pred_region
          _
        $region28: #{apply.1} parent=11 // pred_fallthru
          _
        // Predicated region
        $region29: #{apply.1} parent=11 // pred_check
          %p365 = pneg %p155
        $region30: #{apply.1} parent=11 // pred_check_branch
          %367 = sbr.rel (%p365) target = $region32
        $region31: #{apply.1} parent=11 // pred_region
          %s369 = ssub.s32 2048, 2048
          %370 = vsyncadd [#allocation6], %s369
          %s371 = sshll.u32 [#allocation5], 4
          %s372 = int_to_ptr.vmem [resolvable:$true] %s371
          %377 = dma.hbm_to_vmem [thread:$0]  %s5, 2048, %s372, [#allocation6], 128, 128, 8
        $region32: #{apply.1} parent=11 // pred_fallthru
          _
        // Predicated region
        $region33: #{apply.1} parent=11 // pred_check
          %p378 = pneg %p176
        $region34: #{apply.1} parent=11 // pred_check_branch
          %380 = sbr.rel (%p378) target = $region36
        $region35: #{apply.1} parent=11 // pred_region
          _
        $region36: #{apply.1} parent=11 // pred_fallthru
          _
        // Predicated region
        $region37: #{apply.1} parent=11 // pred_check
          %p381 = pneg %p197
        $region38: #{apply.1} parent=11 // pred_check_branch
          %383 = sbr.rel (%p381) target = $region40
        $region39: #{apply.1} parent=11 // pred_region
          _
        $region40: #{apply.1} parent=11 // pred_fallthru
          _
        // Predicated region
        $region41: #{apply.1} parent=11 // pred_check
          %p384 = pneg %p218
        $region42: #{apply.1} parent=11 // pred_check_branch
          %386 = sbr.rel (%p384) target = $region44
        $region43: #{apply.1} parent=11 // pred_region
          _
        $region44: #{apply.1} parent=11 // pred_fallthru
          _
        // Predicated region
        $region45: #{apply.1} parent=11 // pred_check
          %p387 = pneg %p239
        $region46: #{apply.1} parent=11 // pred_check_branch
          %389 = sbr.rel (%p387) target = $region48
        $region47: #{apply.1} parent=11 // pred_region
          %s391 = ssub.s32 2048, 2048
          %392 = vsyncadd [#allocation6], %s391
          %s393 = sshll.u32 [#allocation7], 4
          %s394 = int_to_ptr.vmem [resolvable:$true] %s393
          %399 = dma.hbm_to_vmem [thread:$0]  %s9, 2048, %s394, [#allocation6], 128, 128, 8
        $region48: #{apply.1} parent=11 // pred_fallthru
          _
        // Predicated region
        $region49: #{apply.1} parent=11 // pred_check
          %p400 = pneg %p260
        $region50: #{apply.1} parent=11 // pred_check_branch
          %402 = sbr.rel (%p400) target = $region52
        $region51: #{apply.1} parent=11 // pred_region
          _
        $region52: #{apply.1} parent=11 // pred_fallthru
          _
        // Predicated region
        $region53: #{apply.1} parent=11 // pred_check
          %p403 = pneg %p281
        $region54: #{apply.1} parent=11 // pred_check_branch
          %405 = sbr.rel (%p403) target = $region56
        $region55: #{apply.1} parent=11 // pred_region
          _
        $region56: #{apply.1} parent=11 // pred_fallthru
          _
        // Predicated region
        $region57: #{apply.1} parent=11 // pred_check
          %p406 = pneg %p302
        $region58: #{apply.1} parent=11 // pred_check_branch
          %408 = sbr.rel (%p406) target = $region60
        $region59: #{apply.1} parent=11 // pred_region
          _
        $region60: #{apply.1} parent=11 // pred_fallthru
          _
      $region12: #{apply.1} parent=5 // pred_fallthru
        _
      %p409 = scmp.lt.s32.totalorder %s24, 2
      // Predicated region
      $region61: #{apply.1} parent=5 // pred_check
        %p410 = pneg %p409
      $region62: #{apply.1} parent=5 // pred_check_branch
        %412 = sbr.rel (%p410) target = $region64
      $region63: #{apply.1} parent=5 // pred_region
        // Predicated region
        $region65: #{apply.1} parent=63 // pred_check
          %p413 = pneg %p44
        $region66: #{apply.1} parent=63 // pred_check_branch
          %415 = sbr.rel (%p413) target = $region68
        $region67: #{apply.1} parent=63 // pred_region
          %p416 = scmp.lt.s32.totalorder %s24, 1
          %s417 = scalar_select %p416, %s24, 1
          %s418 = smul.addr %s417, 8
          %s419 = scalar_lea.vmem %s0, %s418
        $region68: #{apply.1} parent=63 // pred_fallthru
          _
      $region64: #{apply.1} parent=5 // pred_fallthru
        _
      %p420 = scmp.le.s32.totalorder 1, %s24
      %p421 = scmp.lt.s32.totalorder %s24, 3
      %p422 = pnand %p420, %p421
      %p423 = pneg %p422
      // Predicated region
      $region69: #{apply.1} parent=5 // pred_check
        _
      $region70: #{apply.1} parent=5 // pred_check_branch
        %425 = sbr.rel (%p422) target = $region72
      $region71: #{apply.1} parent=5 // pred_region
        %s426 = ssub.s32 %s24, 1
        // Predicated region
        $region73: #{apply.1} parent=71 // pred_check
          %p427 = pneg %p71
        $region74: #{apply.1} parent=71 // pred_check_branch
          %429 = sbr.rel (%p427) target = $region76
        $region75: #{apply.1} parent=71 // pred_region
          %430 = dma.done [#allocation3], 2048
        $region76: #{apply.1} parent=71 // pred_fallthru
          _
        // Predicated region
        $region77: #{apply.1} parent=71 // pred_check
          %p431 = pneg %p155
        $region78: #{apply.1} parent=71 // pred_check_branch
          %433 = sbr.rel (%p431) target = $region80
        $region79: #{apply.1} parent=71 // pred_region
          %434 = dma.done [#allocation6], 2048
        $region80: #{apply.1} parent=71 // pred_fallthru
          _
        // Predicated region
        $region81: #{apply.1} parent=71 // pred_check
          %p435 = pneg %p239
        $region82: #{apply.1} parent=71 // pred_check_branch
          %437 = sbr.rel (%p435) target = $region84
        $region83: #{apply.1} parent=71 // pred_region
          %438 = dma.done [#allocation6], 2048
        $region84: #{apply.1} parent=71 // pred_fallthru
          _
        %p439 = scmp.lt.s32.totalorder %s29, 1
        %s440 = scalar_select %p439, %s29, 1
        %s441 = smul.addr %s440, 8
        %s442 = scalar_lea.vmem %s0, %s441
        %p443 = pneg %p50
        %p444 = pneg %p47
        %p445 = pneg %p71
        %p446 = pneg %p68
        %p447 = pneg %p92
        %p448 = pneg %p89
        %p449 = pneg %p113
        %p450 = pneg %p110
        %p451 = pneg %p134
        %p452 = pneg %p131
        %p453 = pneg %p155
        %p454 = pneg %p152
        %p455 = pneg %p176
        %p456 = pneg %p173
        %p457 = pneg %p197
        %p458 = pneg %p194
        %p459 = pneg %p218
        %p460 = pneg %p215
        %p461 = pneg %p239
        %p462 = pneg %p236
        %p463 = pneg %p260
        %p464 = pneg %p257
        %p465 = pneg %p281
        %p466 = pneg %p278
        %p467 = pneg %p302
        %p468 = pneg %p299
        %p469 = pneg %p328
        %p470 = pneg %p325
        %s471 = sand.u32 %s315, 1
        %s472 = scalar_lea.sflag [#allocation4], %s471
        %s473 = sand.u32 %s315, 1
        %s474 = smul.addr %s473, 8
        %s475 = scalar_lea.vmem [#allocation8], %s474
        %p476 = scmp.lt.s32.totalorder %s29, 1
        %s477 = scalar_select %p476, %s29, 1
        %s478 = smul.addr %s477, 8
        %s479 = scalar_lea.vmem %s0, %s478
        %v480 = vld [vmem:[%s479] sm:$0xff]
        %v481 = vld [vmem:[#allocation2] sm:$0xff]
        %v482 = vld [vmem:[#allocation2 + $0x8] sm:$0xff]
        %v483 = vld [vmem:[#allocation2 + $0x10] sm:$0xff]
        %v484 = vld [vmem:[#allocation2 + $0x18] sm:$0xff]
        %v485 = vld [vmem:[#allocation2 + $0x20] sm:$0xff]
        %v486 = vld [vmem:[#allocation2 + $0x28] sm:$0xff]
        %v487 = vld [vmem:[#allocation2 + $0x30] sm:$0xff]
        %v488 = vld [vmem:[#allocation2 + $0x38] sm:$0xff]
        %v489 = vld [vmem:[#allocation2 + $0x40] sm:$0xff]
        %v490 = vld [vmem:[#allocation2 + $0x48] sm:$0xff]
        %v491 = vld [vmem:[#allocation2 + $0x50] sm:$0xff]
        %v492 = vld [vmem:[#allocation2 + $0x58] sm:$0xff]
        %v493 = vld [vmem:[#allocation2 + $0x60] sm:$0xff]
        %v494 = vld [vmem:[#allocation2 + $0x68] sm:$0xff]
        %v495 = vld [vmem:[#allocation2 + $0x70] sm:$0xff]
        %v496 = vld [vmem:[#allocation2 + $0x78] sm:$0xff]
        %v497 = vld [vmem:[%s2] sm:$0x1]
        %v498 = vld [vmem:[%s3] sm:$0x1]
        %v499 = vld [vmem:[%s4] sm:$0x1]
        %v501 = vlaneseq
        %v502 = vshrl.u32 %v501, 7
        %v503 = vsub.s32 0, %v502
        %v504 = vrot.slane %v497, %v503
        %506 = vmatprep.subr.mxu0 0.0
        %507 = vmatpush1.msra.mxu0 %v481
        %508 = vmatprep.subr.mxu0 0.0
        %509 = vmatpush1.msra.mxu0 %v482
        %510 = vmatprep.subr.mxu0 0.0
        %511 = vmatpush1.msra.mxu0 %v483
        %512 = vmatprep.subr.mxu0 0.0
        %513 = vmatpush1.msra.mxu0 %v484
        %514 = vmatprep.subr.mxu0 0.0
        %515 = vmatpush1.msra.mxu0 %v485
        %516 = vmatprep.subr.mxu0 0.0
        %517 = vmatpush1.msra.mxu0 %v486
        %518 = vmatprep.subr.mxu0 0.0
        %519 = vmatpush1.msra.mxu0 %v487
        %520 = vmatprep.subr.mxu0 0.0
        %521 = vmatpush1.msra.mxu0 %v488
        %522 = vmatprep.subr.mxu0 0.0
        %523 = vmatpush1.msra.mxu0 %v489
        %524 = vmatprep.subr.mxu0 0.0
        %525 = vmatpush1.msra.mxu0 %v490
        %526 = vmatprep.subr.mxu0 0.0
        %527 = vmatpush1.msra.mxu0 %v491
        %528 = vmatprep.subr.mxu0 0.0
        %529 = vmatpush1.msra.mxu0 %v492
        %530 = vmatprep.subr.mxu0 0.0
        %531 = vmatpush1.msra.mxu0 %v493
        %532 = vmatprep.subr.mxu0 0.0
        %533 = vmatpush1.msra.mxu0 %v494
        %534 = vmatprep.subr.mxu0 0.0
        %535 = vmatpush1.msra.mxu0 %v495
        %536 = vmatprep.subr.mxu0 0.0
        %537 = vmatpush1.msra.mxu0 %v496
        %538 = vmatprep.subr.mxu0 0.0
        %539 = vmatpush1.msra.mxu0 0.0
        %540 = vmatprep.subr.mxu0 0.0
        %541 = vmatpush1.msra.mxu0 0.0
        %542 = vmatprep.subr.mxu0 0.0
        %543 = vmatpush1.msra.mxu0 0.0
        %544 = vmatprep.subr.mxu0 0.0
        %545 = vmatpush1.msra.mxu0 0.0
        %546 = vmatprep.subr.mxu0 0.0
        %547 = vmatpush1.msra.mxu0 0.0
        %548 = vmatprep.subr.mxu0 0.0
        %549 = vmatpush1.msra.mxu0 0.0
        %550 = vmatprep.subr.mxu0 0.0
        %551 = vmatpush1.msra.mxu0 0.0
        %552 = vmatprep.subr.mxu0 0.0
        %553 = vmatpush1.msra.mxu0 0.0
        %554 = vmatprep.subr.mxu0 0.0
        %555 = vmatpush1.msra.mxu0 0.0
        %556 = vmatprep.subr.mxu0 0.0
        %557 = vmatpush1.msra.mxu0 0.0
        %558 = vmatprep.subr.mxu0 0.0
        %559 = vmatpush1.msra.mxu0 0.0
        %560 = vmatprep.subr.mxu0 0.0
        %561 = vmatpush1.msra.mxu0 0.0
        %562 = vmatprep.subr.mxu0 0.0
        %563 = vmatpush1.msra.mxu0 0.0
        %564 = vmatprep.subr.mxu0 0.0
        %565 = vmatpush1.msra.mxu0 0.0
        %566 = vmatprep.subr.mxu0 0.0
        %567 = vmatpush1.msra.mxu0 0.0
        %568 = vmatprep.subr.mxu0 0.0
        %569 = vmatpush1.msra.mxu0 0.0
        %570 = vmatprep.mubr.f32.mxu0 0.0
        %571 = vmatmul.mubr.f32.gmra.mrb[0].mxu0 %v480
        %v572 = vpop.f32.mrb[0].mxu0
        %v573 = vadd.f32 %v504, %v572
        %v574 = vpop.f32.mrb[0].mxu0
        %575 = vdwg.mxu0
        %576 = vadd.xlane.f32.xlu0 %v573
        %v577 = vpop.xlane.xlu0 %576
        %v578 = vmul.f32 %v577, 0.03125
        %v579 = vmul.f32 %v573, %v573
        %580 = vadd.xlane.f32.xlu0 %v579
        %v581 = vpop.xlane.xlu0 %580
        %v582 = vmul.f32 %v581, 0.03125
        %v583 = vmul.f32 %v578, %v578
        %v584 = vsub.f32 %v582, %v583
        %v585 = vmax.f32 %v584, 0.0
        %v586 = vsub.f32 %v573, %v578
        %v587 = vadd.f32 %v585, 1e-05
        %v588 = vrsqrt.pop %v587
        %v589 = vmul.f32 %v586, %v588
        %v591 = vlaneseq
        %v592 = vshrl.u32 %v591, 7
        %v593 = vsub.s32 0, %v592
        %v594 = vrot.slane %v498, %v593
        %v596 = vmul.f32 %v589, %v594
        %v598 = vlaneseq
        %v599 = vshrl.u32 %v598, 7
        %v600 = vsub.s32 0, %v599
        %v601 = vrot.slane %v499, %v600
        %v603 = vadd.f32 %v596, %v601
        %v604 = vmul.f32 %v603, 0.5
        %v605 = vmul.f32 %v603, 0.70710677
        %v606 = verf.f32.pop %v605
        %v607 = vadd.f32 %v606, 1.0
        %v608 = vmul.f32 %v604, %v607
        %v609 = vld [vmem:[#allocation5] sm:$0xff]
        %v610 = vld [vmem:[#allocation5 + $0x8] sm:$0xff]
        %v611 = vld [vmem:[#allocation5 + $0x10] sm:$0xff]
        %v612 = vld [vmem:[#allocation5 + $0x18] sm:$0xff]
        %v613 = vld [vmem:[#allocation5 + $0x20] sm:$0xff]
        %v614 = vld [vmem:[#allocation5 + $0x28] sm:$0xff]
        %v615 = vld [vmem:[#allocation5 + $0x30] sm:$0xff]
        %v616 = vld [vmem:[#allocation5 + $0x38] sm:$0xff]
        %v617 = vld [vmem:[#allocation5 + $0x40] sm:$0xff]
        %v618 = vld [vmem:[#allocation5 + $0x48] sm:$0xff]
        %v619 = vld [vmem:[#allocation5 + $0x50] sm:$0xff]
        %v620 = vld [vmem:[#allocation5 + $0x58] sm:$0xff]
        %v621 = vld [vmem:[#allocation5 + $0x60] sm:$0xff]
        %v622 = vld [vmem:[#allocation5 + $0x68] sm:$0xff]
        %v623 = vld [vmem:[#allocation5 + $0x70] sm:$0xff]
        %v624 = vld [vmem:[#allocation5 + $0x78] sm:$0xff]
        %v625 = vld [vmem:[%s6] sm:$0x1]
        %v626 = vld [vmem:[%s7] sm:$0x1]
        %v627 = vld [vmem:[%s8] sm:$0x1]
        %v629 = vlaneseq
        %v630 = vshrl.u32 %v629, 7
        %v631 = vsub.s32 0, %v630
        %v632 = vrot.slane %v625, %v631
        %634 = vmatprep.subr.mxu0 0.0
        %635 = vmatpush1.msra.mxu0 %v609
        %636 = vmatprep.subr.mxu0 0.0
        %637 = vmatpush1.msra.mxu0 %v610
        %638 = vmatprep.subr.mxu0 0.0
        %639 = vmatpush1.msra.mxu0 %v611
        %640 = vmatprep.subr.mxu0 0.0
        %641 = vmatpush1.msra.mxu0 %v612
        %642 = vmatprep.subr.mxu0 0.0
        %643 = vmatpush1.msra.mxu0 %v613
        %644 = vmatprep.subr.mxu0 0.0
        %645 = vmatpush1.msra.mxu0 %v614
        %646 = vmatprep.subr.mxu0 0.0
        %647 = vmatpush1.msra.mxu0 %v615
        %648 = vmatprep.subr.mxu0 0.0
        %649 = vmatpush1.msra.mxu0 %v616
        %650 = vmatprep.subr.mxu0 0.0
        %651 = vmatpush1.msra.mxu0 %v617
        %652 = vmatprep.subr.mxu0 0.0
        %653 = vmatpush1.msra.mxu0 %v618
        %654 = vmatprep.subr.mxu0 0.0
        %655 = vmatpush1.msra.mxu0 %v619
        %656 = vmatprep.subr.mxu0 0.0
        %657 = vmatpush1.msra.mxu0 %v620
        %658 = vmatprep.subr.mxu0 0.0
        %659 = vmatpush1.msra.mxu0 %v621
        %660 = vmatprep.subr.mxu0 0.0
        %661 = vmatpush1.msra.mxu0 %v622
        %662 = vmatprep.subr.mxu0 0.0
        %663 = vmatpush1.msra.mxu0 %v623
        %664 = vmatprep.subr.mxu0 0.0
        %665 = vmatpush1.msra.mxu0 %v624
        %666 = vmatprep.subr.mxu0 0.0
        %667 = vmatpush1.msra.mxu0 0.0
        %668 = vmatprep.subr.mxu0 0.0
        %669 = vmatpush1.msra.mxu0 0.0
        %670 = vmatprep.subr.mxu0 0.0
        %671 = vmatpush1.msra.mxu0 0.0
        %672 = vmatprep.subr.mxu0 0.0
        %673 = vmatpush1.msra.mxu0 0.0
        %674 = vmatprep.subr.mxu0 0.0
        %675 = vmatpush1.msra.mxu0 0.0
        %676 = vmatprep.subr.mxu0 0.0
        %677 = vmatpush1.msra.mxu0 0.0
        %678 = vmatprep.subr.mxu0 0.0
        %679 = vmatpush1.msra.mxu0 0.0
        %680 = vmatprep.subr.mxu0 0.0
        %681 = vmatpush1.msra.mxu0 0.0
        %682 = vmatprep.subr.mxu0 0.0
        %683 = vmatpush1.msra.mxu0 0.0
        %684 = vmatprep.subr.mxu0 0.0
        %685 = vmatpush1.msra.mxu0 0.0
        %686 = vmatprep.subr.mxu0 0.0
        %687 = vmatpush1.msra.mxu0 0.0
        %688 = vmatprep.subr.mxu0 0.0
        %689 = vmatpush1.msra.mxu0 0.0
        %690 = vmatprep.subr.mxu0 0.0
        %691 = vmatpush1.msra.mxu0 0.0
        %692 = vmatprep.subr.mxu0 0.0
        %693 = vmatpush1.msra.mxu0 0.0
        %694 = vmatprep.subr.mxu0 0.0
        %695 = vmatpush1.msra.mxu0 0.0
        %696 = vmatprep.subr.mxu0 0.0
        %697 = vmatpush1.msra.mxu0 0.0
        %698 = vmatprep.mubr.f32.mxu0 0.0
        %699 = vmatmul.mubr.f32.gmra.mrb[0].mxu0 %v608
        %v700 = vpop.f32.mrb[0].mxu0
        %v701 = vadd.f32 %v632, %v700
        %v702 = vpop.f32.mrb[0].mxu0
        %703 = vdwg.mxu0
        %704 = vadd.xlane.f32.xlu0 %v701
        %v705 = vpop.xlane.xlu0 %704
        %v706 = vmul.f32 %v705, 0.03125
        %v707 = vmul.f32 %v701, %v701
        %708 = vadd.xlane.f32.xlu0 %v707
        %v709 = vpop.xlane.xlu0 %708
        %v710 = vmul.f32 %v709, 0.03125
        %v711 = vmul.f32 %v706, %v706
        %v712 = vsub.f32 %v710, %v711
        %v713 = vmax.f32 %v712, 0.0
        %v714 = vsub.f32 %v701, %v706
        %v715 = vadd.f32 %v713, 1e-05
        %v716 = vrsqrt.pop %v715
        %v717 = vmul.f32 %v714, %v716
        %v719 = vlaneseq
        %v720 = vshrl.u32 %v719, 7
        %v721 = vsub.s32 0, %v720
        %v722 = vrot.slane %v626, %v721
        %v724 = vmul.f32 %v717, %v722
        %v726 = vlaneseq
        %v727 = vshrl.u32 %v726, 7
        %v728 = vsub.s32 0, %v727
        %v729 = vrot.slane %v627, %v728
        %v731 = vadd.f32 %v724, %v729
        %v732 = vmul.f32 %v731, 0.5
        %v733 = vmul.f32 %v731, 0.70710677
        %v734 = verf.f32.pop %v733
        %v735 = vadd.f32 %v734, 1.0
        %v736 = vmul.f32 %v732, %v735
        %v737 = vld [vmem:[#allocation7] sm:$0xff]
        %v738 = vld [vmem:[#allocation7 + $0x8] sm:$0xff]
        %v739 = vld [vmem:[#allocation7 + $0x10] sm:$0xff]
        %v740 = vld [vmem:[#allocation7 + $0x18] sm:$0xff]
        %v741 = vld [vmem:[#allocation7 + $0x20] sm:$0xff]
        %v742 = vld [vmem:[#allocation7 + $0x28] sm:$0xff]
        %v743 = vld [vmem:[#allocation7 + $0x30] sm:$0xff]
        %v744 = vld [vmem:[#allocation7 + $0x38] sm:$0xff]
        %v745 = vld [vmem:[#allocation7 + $0x40] sm:$0xff]
        %v746 = vld [vmem:[#allocation7 + $0x48] sm:$0xff]
        %v747 = vld [vmem:[#allocation7 + $0x50] sm:$0xff]
        %v748 = vld [vmem:[#allocation7 + $0x58] sm:$0xff]
        %v749 = vld [vmem:[#allocation7 + $0x60] sm:$0xff]
        %v750 = vld [vmem:[#allocation7 + $0x68] sm:$0xff]
        %v751 = vld [vmem:[#allocation7 + $0x70] sm:$0xff]
        %v752 = vld [vmem:[#allocation7 + $0x78] sm:$0xff]
        %v753 = vld [vmem:[%s10] sm:$0x1]
        %v754 = vld [vmem:[%s11] sm:$0x1]
        %v755 = vld [vmem:[%s12] sm:$0x1]
        %v757 = vlaneseq
        %v758 = vshrl.u32 %v757, 7
        %v759 = vsub.s32 0, %v758
        %v760 = vrot.slane %v753, %v759
        %762 = vmatprep.subr.mxu0 0.0
        %763 = vmatpush1.msra.mxu0 %v737
        %764 = vmatprep.subr.mxu0 0.0
        %765 = vmatpush1.msra.mxu0 %v738
        %766 = vmatprep.subr.mxu0 0.0
        %767 = vmatpush1.msra.mxu0 %v739
        %768 = vmatprep.subr.mxu0 0.0
        %769 = vmatpush1.msra.mxu0 %v740
        %770 = vmatprep.subr.mxu0 0.0
        %771 = vmatpush1.msra.mxu0 %v741
        %772 = vmatprep.subr.mxu0 0.0
        %773 = vmatpush1.msra.mxu0 %v742
        %774 = vmatprep.subr.mxu0 0.0
        %775 = vmatpush1.msra.mxu0 %v743
        %776 = vmatprep.subr.mxu0 0.0
        %777 = vmatpush1.msra.mxu0 %v744
        %778 = vmatprep.subr.mxu0 0.0
        %779 = vmatpush1.msra.mxu0 %v745
        %780 = vmatprep.subr.mxu0 0.0
        %781 = vmatpush1.msra.mxu0 %v746
        %782 = vmatprep.subr.mxu0 0.0
        %783 = vmatpush1.msra.mxu0 %v747
        %784 = vmatprep.subr.mxu0 0.0
        %785 = vmatpush1.msra.mxu0 %v748
        %786 = vmatprep.subr.mxu0 0.0
        %787 = vmatpush1.msra.mxu0 %v749
        %788 = vmatprep.subr.mxu0 0.0
        %789 = vmatpush1.msra.mxu0 %v750
        %790 = vmatprep.subr.mxu0 0.0
        %791 = vmatpush1.msra.mxu0 %v751
        %792 = vmatprep.subr.mxu0 0.0
        %793 = vmatpush1.msra.mxu0 %v752
        %794 = vmatprep.subr.mxu0 0.0
        %795 = vmatpush1.msra.mxu0 0.0
        %796 = vmatprep.subr.mxu0 0.0
        %797 = vmatpush1.msra.mxu0 0.0
        %798 = vmatprep.subr.mxu0 0.0
        %799 = vmatpush1.msra.mxu0 0.0
        %800 = vmatprep.subr.mxu0 0.0
        %801 = vmatpush1.msra.mxu0 0.0
        %802 = vmatprep.subr.mxu0 0.0
        %803 = vmatpush1.msra.mxu0 0.0
        %804 = vmatprep.subr.mxu0 0.0
        %805 = vmatpush1.msra.mxu0 0.0
        %806 = vmatprep.subr.mxu0 0.0
        %807 = vmatpush1.msra.mxu0 0.0
        %808 = vmatprep.subr.mxu0 0.0
        %809 = vmatpush1.msra.mxu0 0.0
        %810 = vmatprep.subr.mxu0 0.0
        %811 = vmatpush1.msra.mxu0 0.0
        %812 = vmatprep.subr.mxu0 0.0
        %813 = vmatpush1.msra.mxu0 0.0
        %814 = vmatprep.subr.mxu0 0.0
        %815 = vmatpush1.msra.mxu0 0.0
        %816 = vmatprep.subr.mxu0 0.0
        %817 = vmatpush1.msra.mxu0 0.0
        %818 = vmatprep.subr.mxu0 0.0
        %819 = vmatpush1.msra.mxu0 0.0
        %820 = vmatprep.subr.mxu0 0.0
        %821 = vmatpush1.msra.mxu0 0.0
        %822 = vmatprep.subr.mxu0 0.0
        %823 = vmatpush1.msra.mxu0 0.0
        %824 = vmatprep.subr.mxu0 0.0
        %825 = vmatpush1.msra.mxu0 0.0
        %826 = vmatprep.mubr.f32.mxu0 0.0
        %827 = vmatmul.mubr.f32.gmra.mrb[0].mxu0 %v736
        %v828 = vpop.f32.mrb[0].mxu0
        %v829 = vadd.f32 %v760, %v828
        %v830 = vpop.f32.mrb[0].mxu0
        %831 = vdwg.mxu0
        %832 = vadd.xlane.f32.xlu0 %v829
        %v833 = vpop.xlane.xlu0 %832
        %v834 = vmul.f32 %v833, 0.0625
        %v835 = vmul.f32 %v829, %v829
        %836 = vadd.xlane.f32.xlu0 %v835
        %v837 = vpop.xlane.xlu0 %836
        %v838 = vmul.f32 %v837, 0.0625
        %v839 = vmul.f32 %v834, %v834
        %v840 = vsub.f32 %v838, %v839
        %v841 = vmax.f32 %v840, 0.0
        %v842 = vsub.f32 %v829, %v834
        %v843 = vadd.f32 %v841, 1e-05
        %v844 = vrsqrt.pop %v843
        %v845 = vmul.f32 %v842, %v844
        %v847 = vlaneseq
        %v848 = vshrl.u32 %v847, 7
        %v849 = vsub.s32 0, %v848
        %v850 = vrot.slane %v754, %v849
        %v852 = vmul.f32 %v845, %v850
        %v854 = vlaneseq
        %v855 = vshrl.u32 %v854, 7
        %v856 = vsub.s32 0, %v855
        %v857 = vrot.slane %v755, %v856
        %v859 = vadd.f32 %v852, %v857
        %860 = vst [vmem:[%s475] sm:$0xff] %v859
        %s861 = sand.u32 %s315, 1
        %s862 = scalar_lea.sflag [#allocation4], %s861
        %s863 = sand.u32 %s315, 1
        %s864 = smul.addr %s863, 8
        %s865 = scalar_lea.vmem [#allocation8], %s864
        // Predicated region
        $region85: #{apply.1} parent=71 // pred_check
          %p866 = pneg %p325
        $region86: #{apply.1} parent=71 // pred_check_branch
          %868 = sbr.rel (%p866) target = $region88
        $region87: #{apply.1} parent=71 // pred_region
          %s870 = ssub.s32 128, 128
          %871 = vsyncadd %s862, %s870
          %s872 = smul.addr %s29, 128
          %s873 = scalar_lea.hbm %s13, %s872
          %s875 = sshll.u32 %s865, 4
          %s876 = int_to_ptr.vmem [resolvable:$true] %s875
          %878 = dma.vmem_to_hbm [thread:$0]  %s876, 128, %s873, %s862
        $region88: #{apply.1} parent=71 // pred_fallthru
          _
      $region72: #{apply.1} parent=5 // pred_fallthru
        _
      %p879 = scmp.le.s32.totalorder 2, %s24
      // Predicated region
      $region89: #{apply.1} parent=5 // pred_check
        %p880 = pneg %p879
      $region90: #{apply.1} parent=5 // pred_check_branch
        %882 = sbr.rel (%p880) target = $region92
      $region91: #{apply.1} parent=5 // pred_region
        %s883 = ssub.s32 %s24, 2
        // Predicated region
        $region93: #{apply.1} parent=91 // pred_check
          %p884 = pneg %p331
        $region94: #{apply.1} parent=91 // pred_check_branch
          %886 = sbr.rel (%p884) target = $region96
        $region95: #{apply.1} parent=91 // pred_region
          %s887 = sand.u32 %s316, 1
          %s888 = scalar_lea.sflag [#allocation4], %s887
          %s889 = sand.u32 %s316, 1
          %s890 = smul.addr %s889, 8
          %s891 = scalar_lea.vmem [#allocation8], %s890
          %892 = dma.done %s888, 128
        $region96: #{apply.1} parent=91 // pred_fallthru
          _
      $region92: #{apply.1} parent=5 // pred_fallthru
        _
    $region6: #{apply.1} parent=1 // loop_footer
      %s28 = sadd.s32 1, %s24
    $region7: #{apply.1} parent=1 // loop_footer_branch
      %23 = sbr.rel target = $region3
    $region8: #{apply.1} parent=1 // loop_exit
      _
    %893 = vsyncpa [#allocation3], 1
    %s894 = scalar_lea.sflag [#allocation3], 1
    %895 = vsyncpa %s894, 1
    %896 = vsyncpa [#allocation6], 1
    %897 = vsyncpa [#allocation4], 1
    %s898 = scalar_lea.sflag [#allocation4], 1
    %899 = vsyncpa %s898, 1

</llo_original>
